<compile_context>
chip_gen: v6e
topology: v6e:2x2x1
jax: 0.10.0
libtpu: 0.0.40
codegen_flags: <defaults>
</compile_context>

<pallas_src>
import functools

import jax
import jax.numpy as jnp
from jax.experimental import pallas as pl
from jax.experimental.pallas import tpu as pltpu

# Dims taken from the PyTorch module's globals.
INPUT_DIM = 500
HIDDEN_DIM = 400
LATENT_DIM = 20
OUTPUT_DIM = 28 * 28  # 784


def _round_up(n, m):
    return ((n + m - 1) // m) * m


def _choose_tile(b, tb):
    """Batch tile: multiple of 8 (sublane rule), capped so large batches keep
    >=4 grid steps for megacore sharding, never larger than needed."""
    tb = _round_up(max(int(tb), 8), 8)
    quarter = _round_up(-(-b // 4), 8)          # ceil(b/4) rounded up to 8
    return max(8, min(tb, quarter))


def _vae_kernel(x_ref, eps_ref,
                w1_ref, b1_ref,
                wmu_ref, bmu_ref,
                w3_ref, b3_ref,
                w4_ref, b4_ref,
                recon_ref, mulv_ref):
    """Fused VAE forward for one batch tile.

    x_ref is f32 [TB, INPUT_DIM] (cast to bf16 in-kernel); weights bf16,
    biases f32.  Matmuls accumulate in f32 on the MXU; elementwise math f32.
    """
    x = x_ref[...].astype(jnp.bfloat16)          # in-kernel cast, no extra HBM pass

    # encode: h1 = relu(x @ W1 + b1)
    h1 = jnp.dot(x, w1_ref[...], preferred_element_type=jnp.float32) + b1_ref[...]
    h1 = jnp.maximum(h1, 0.0).astype(jnp.bfloat16)

    # fused latent projection: [mu | logvar] = h1 @ [W21 | W22] + [b21 | b22]
    mulv = jnp.dot(h1, wmu_ref[...], preferred_element_type=jnp.float32) + bmu_ref[...]
    mu = mulv[:, :LATENT_DIM]
    logvar = mulv[:, LATENT_DIM:]

    # reparameterize: z = mu + eps * exp(0.5 * logvar)   (f32 elementwise)
    z = mu + eps_ref[...] * jnp.exp(0.5 * logvar)

    # decode: h3 = relu(z @ W3 + b3) ; recon = sigmoid(h3 @ W4 + b4)
    h3 = jnp.dot(z.astype(jnp.bfloat16), w3_ref[...],
                 preferred_element_type=jnp.float32) + b3_ref[...]
    h3 = jnp.maximum(h3, 0.0).astype(jnp.bfloat16)
    logits = jnp.dot(h3, w4_ref[...], preferred_element_type=jnp.float32) + b4_ref[...]

    recon_ref[...] = jax.nn.sigmoid(logits).astype(recon_ref.dtype)   # bf16 store
    mulv_ref[...] = mulv


@functools.partial(jax.jit, static_argnames=("tb",))
def vae_forward(x, eps, params, *, tb=512):
    """x:   [B, INPUT_DIM]  f32 (already flattened, like x.view(-1, input_dim)).
       eps: [B, LATENT_DIM] f32 (the torch.randn_like noise, supplied here).
       Returns (recon [B, OUTPUT_DIM] bf16, mu [B, LATENT] f32, logvar [B, LATENT] f32)."""
    (w1, b1, wmu, bmu, w3, b3, w4, b4) = params

    b = x.shape[0]
    tile_b = _choose_tile(b, tb)
    b_pad = _round_up(b, tile_b)
    if b_pad != b:                       # only materialize padded copies if needed
        x = jnp.pad(x, ((0, b_pad - b), (0, 0)))
        eps = jnp.pad(eps, ((0, b_pad - b), (0, 0)))

    grid = (b_pad // tile_b,)

    # Per-batch-tile specs (pipelined) + resident weight/bias specs.
    def batch_spec(feat):
        return pl.BlockSpec((tile_b, feat), lambda i: (i, 0))

    def const_spec(r, c):
        return pl.BlockSpec((r, c), lambda i: (0, 0))

    in_specs = [
        batch_spec(INPUT_DIM),                      # x (f32)
        batch_spec(LATENT_DIM),                     # eps
        const_spec(INPUT_DIM, HIDDEN_DIM),          # w1
        const_spec(1, HIDDEN_DIM),                  # b1
        const_spec(HIDDEN_DIM, 2 * LATENT_DIM),     # wmu (fc21 | fc22)
        const_spec(1, 2 * LATENT_DIM),              # bmu
        const_spec(LATENT_DIM, HIDDEN_DIM),         # w3
        const_spec(1, HIDDEN_DIM),                  # b3
        const_spec(HIDDEN_DIM, OUTPUT_DIM),         # w4
        const_spec(1, OUTPUT_DIM),                  # b4
    ]
    out_specs = (
        batch_spec(OUTPUT_DIM),                     # recon (bf16)
        batch_spec(2 * LATENT_DIM),                 # [mu | logvar] (f32)
    )
    out_shapes = (
        jax.ShapeDtypeStruct((b_pad, OUTPUT_DIM), jnp.bfloat16),
        jax.ShapeDtypeStruct((b_pad, 2 * LATENT_DIM), jnp.float32),
    )

    flops = 2 * b_pad * (INPUT_DIM * HIDDEN_DIM
                         + HIDDEN_DIM * 2 * LATENT_DIM
                         + LATENT_DIM * HIDDEN_DIM
                         + HIDDEN_DIM * OUTPUT_DIM)
    weight_bytes = 2 * (INPUT_DIM * HIDDEN_DIM + HIDDEN_DIM * 2 * LATENT_DIM
                        + LATENT_DIM * HIDDEN_DIM + HIDDEN_DIM * OUTPUT_DIM) \
        + 4 * (HIDDEN_DIM + 2 * LATENT_DIM + HIDDEN_DIM + OUTPUT_DIM)
    io_bytes = b_pad * (4 * INPUT_DIM          # x f32 read
                        + 4 * LATENT_DIM       # eps f32 read
                        + 2 * OUTPUT_DIM       # recon bf16 write
                        + 4 * 2 * LATENT_DIM)  # mu|logvar f32 write

    recon, mulv = pl.pallas_call(
        _vae_kernel,
        out_shape=out_shapes,
        grid=grid,
        in_specs=in_specs,
        out_specs=out_specs,
        compiler_params=pltpu.CompilerParams(
            dimension_semantics=("parallel",),
            vmem_limit_bytes=32 << 20,
        ),
        cost_estimate=pl.CostEstimate(
            flops=flops,
            transcendentals=b_pad * (LATENT_DIM + OUTPUT_DIM),
            bytes_accessed=weight_bytes + io_bytes,
        ),
    )(x, eps, w1, b1, wmu, bmu, w3, b3, w4, b4)

    recon = recon[:b]
    mu = mulv[:b, :LATENT_DIM]
    logvar = mulv[:b, LATENT_DIM:]
    return recon, mu, logvar


def init_params(key):
    """Deterministic synthetic init (PyTorch-style uniform(-1/sqrt(fan_in), ...)).
       Weights stored [in, out] (bf16) so the kernel does x @ W + b; biases f32.
       fc21/fc22 are concatenated into one [HIDDEN_DIM, 2*LATENT_DIM] projection."""
    def linear(key, fan_in, fan_out):
        kw, kb = jax.random.split(key)
        bound = 1.0 / jnp.sqrt(jnp.float32(fan_in))
        w = jax.random.uniform(kw, (fan_in, fan_out), jnp.float32, -bound, bound)
        bias = jax.random.uniform(kb, (1, fan_out), jnp.float32, -bound, bound)
        return w.astype(jnp.bfloat16), bias

    k1, k21, k22, k3, k4 = jax.random.split(key, 5)
    w1, b1 = linear(k1, INPUT_DIM, HIDDEN_DIM)
    w21, b21 = linear(k21, HIDDEN_DIM, LATENT_DIM)
    w22, b22 = linear(k22, HIDDEN_DIM, LATENT_DIM)
    w3, b3 = linear(k3, LATENT_DIM, HIDDEN_DIM)
    w4, b4 = linear(k4, HIDDEN_DIM, OUTPUT_DIM)
    wmu = jnp.concatenate([w21, w22], axis=1)   # [HIDDEN, 2*LATENT]
    bmu = jnp.concatenate([b21, b22], axis=1)   # [1, 2*LATENT]
    return (w1, b1, wmu, bmu, w3, b3, w4, b4)


def reference_forward(x, eps, params):
    """Pure-JAX reference (same bf16 matmul inputs / f32 accumulation)."""
    (w1, b1, wmu, bmu, w3, b3, w4, b4) = params
    bf = jnp.bfloat16
    h1 = jnp.maximum(
        jnp.dot(x.astype(bf), w1, preferred_element_type=jnp.float32) + b1, 0.0)
    mulv = jnp.dot(h1.astype(bf), wmu, preferred_element_type=jnp.float32) + bmu
    mu, logvar = mulv[:, :LATENT_DIM], mulv[:, LATENT_DIM:]
    z = mu + eps * jnp.exp(0.5 * logvar)
    h3 = jnp.maximum(
        jnp.dot(z.astype(bf), w3, preferred_element_type=jnp.float32) + b3, 0.0)
    recon = jax.nn.sigmoid(
        jnp.dot(h3.astype(bf), w4, preferred_element_type=jnp.float32) + b4)
    return recon, mu, logvar


def _check(recon, mu, logvar, x, eps, params, batch):
    r_ref, mu_ref, lv_ref = reference_forward(x, eps, params)
    assert recon.shape == (batch, OUTPUT_DIM)
    assert recon.dtype == jnp.bfloat16
    assert mu.shape == (batch, LATENT_DIM)
    assert logvar.shape == (batch, LATENT_DIM)
    # recon is a bf16 store of a f32 sigmoid (values in [0,1]); bf16 quantization
    # error is <= ~2e-3 absolute, so a 1e-2 tolerance is comfortably safe.
    assert jnp.allclose(recon.astype(jnp.float32), r_ref, atol=1e-2, rtol=1e-2)
    assert jnp.allclose(mu, mu_ref, atol=5e-3, rtol=5e-3)
    assert jnp.allclose(logvar, lv_ref, atol=5e-3, rtol=5e-3)


if __name__ == "__main__":
    key = jax.random.PRNGKey(0)
    k_params, k_x, k_eps, k_x2, k_eps2 = jax.random.split(key, 5)

    params = init_params(k_params)

    # Small case: single grid step (batch padded 4 -> 8 internally).
    batch = 4
    x = jax.random.normal(k_x, (batch, INPUT_DIM), jnp.float32)
    # torch.randn_like(std) equivalent: standard normal noise, supplied explicitly.
    eps = jax.random.normal(k_eps, (batch, LATENT_DIM), jnp.float32)
    recon, mu, logvar = vae_forward(x, eps, params)
    jax.block_until_ready((recon, mu, logvar))
    _check(recon, mu, logvar, x, eps, params, batch)

    # Multi-tile case: exercises the batch grid + padding path (tb=8 -> grid=(3,)).
    batch2 = 20
    x2 = jax.random.normal(k_x2, (batch2, INPUT_DIM), jnp.float32)
    eps2 = jax.random.normal(k_eps2, (batch2, LATENT_DIM), jnp.float32)
    recon2, mu2, logvar2 = vae_forward(x2, eps2, params, tb=8)
    jax.block_until_ready((recon2, mu2, logvar2))
    _check(recon2, mu2, logvar2, x2, eps2, params, batch2)

    print("KERNEL_OK")
</pallas_src>

<mosaic_0001>
module attributes {stable_mosaic.version = 11 : i64} {
  func.func @_vae_kernel(%arg0: i32, %arg1: memref<8x500xf32, #tpu.memory_space<vmem>>, %arg2: memref<8x20xf32, #tpu.memory_space<vmem>>, %arg3: memref<500x400xbf16, #tpu.memory_space<vmem>>, %arg4: memref<1x400xf32, #tpu.memory_space<vmem>>, %arg5: memref<400x40xbf16, #tpu.memory_space<vmem>>, %arg6: memref<1x40xf32, #tpu.memory_space<vmem>>, %arg7: memref<20x400xbf16, #tpu.memory_space<vmem>>, %arg8: memref<1x400xf32, #tpu.memory_space<vmem>>, %arg9: memref<400x784xbf16, #tpu.memory_space<vmem>>, %arg10: memref<1x784xf32, #tpu.memory_space<vmem>>, %arg11: memref<8x784xbf16, #tpu.memory_space<vmem>>, %arg12: memref<8x40xf32, #tpu.memory_space<vmem>>) attributes {dimension_semantics = [#tpu.dimension_semantics<parallel>], iteration_bounds = array<i64: 1>, scalar_prefetch = 0 : i64, scratch_operands = 0 : i64, tpu.core_type = #tpu.core_type<tc>, window_params = [{transform_indices = @transform_0, window_bounds = array<i64: 8, 500>}, {transform_indices = @transform_1, window_bounds = array<i64: 8, 20>}, {pipeline_mode = #tpu.pipeline_mode<synchronous>, transform_indices = @transform_2, window_bounds = array<i64: 500, 400>}, {pipeline_mode = #tpu.pipeline_mode<synchronous>, transform_indices = @transform_3, window_bounds = array<i64: 1, 400>}, {pipeline_mode = #tpu.pipeline_mode<synchronous>, transform_indices = @transform_4, window_bounds = array<i64: 400, 40>}, {pipeline_mode = #tpu.pipeline_mode<synchronous>, transform_indices = @transform_5, window_bounds = array<i64: 1, 40>}, {pipeline_mode = #tpu.pipeline_mode<synchronous>, transform_indices = @transform_6, window_bounds = array<i64: 20, 400>}, {pipeline_mode = #tpu.pipeline_mode<synchronous>, transform_indices = @transform_7, window_bounds = array<i64: 1, 400>}, {pipeline_mode = #tpu.pipeline_mode<synchronous>, transform_indices = @transform_8, window_bounds = array<i64: 400, 784>}, {pipeline_mode = #tpu.pipeline_mode<synchronous>, transform_indices = @transform_9, window_bounds = array<i64: 1, 784>}, {transform_indices = @transform_10, window_bounds = array<i64: 8, 784>}, {transform_indices = @transform_11, window_bounds = array<i64: 8, 40>}]} {
    %c0 = arith.constant 0 : index
    %c0_0 = arith.constant 0 : index
    %0 = vector.load %arg1[%c0, %c0_0] : memref<8x500xf32, #tpu.memory_space<vmem>>, vector<8x500xf32>
    %1 = arith.truncf %0 : vector<8x500xf32> to vector<8x500xbf16>
    %c0_1 = arith.constant 0 : index
    %c0_2 = arith.constant 0 : index
    %2 = vector.load %arg3[%c0_1, %c0_2] : memref<500x400xbf16, #tpu.memory_space<vmem>>, vector<500x400xbf16>
    %cst = arith.constant dense<0.000000e+00> : vector<8x400xf32>
    %3 = tpu.matmul %1, %2, %cst {dimension_numbers = #tpu.dot_dimension_numbers<[1], [0], [0], [1], [0, 0, 1, 1], [], []>} : vector<8x500xbf16>, vector<500x400xbf16>, vector<8x400xf32> -> vector<8x400xf32>
    %c0_3 = arith.constant 0 : index
    %c0_4 = arith.constant 0 : index
    %4 = vector.load %arg4[%c0_3, %c0_4] : memref<1x400xf32, #tpu.memory_space<vmem>>, vector<1x400xf32>
    %5 = vector.broadcast %4 : vector<1x400xf32> to vector<8x400xf32>
    %6 = arith.addf %3, %5 : vector<8x400xf32>
    %cst_5 = arith.constant 0.000000e+00 : f32
    %7 = vector.broadcast %cst_5 : f32 to vector<8x400xf32>
    %8 = arith.maximumf %6, %7 : vector<8x400xf32>
    %9 = arith.truncf %8 : vector<8x400xf32> to vector<8x400xbf16>
    %c0_6 = arith.constant 0 : index
    %c0_7 = arith.constant 0 : index
    %10 = vector.load %arg5[%c0_6, %c0_7] : memref<400x40xbf16, #tpu.memory_space<vmem>>, vector<400x40xbf16>
    %cst_8 = arith.constant dense<0.000000e+00> : vector<8x40xf32>
    %11 = tpu.matmul %9, %10, %cst_8 {dimension_numbers = #tpu.dot_dimension_numbers<[1], [0], [0], [1], [0, 0, 1, 1], [], []>} : vector<8x400xbf16>, vector<400x40xbf16>, vector<8x40xf32> -> vector<8x40xf32>
    %c0_9 = arith.constant 0 : index
    %c0_10 = arith.constant 0 : index
    %12 = vector.load %arg6[%c0_9, %c0_10] : memref<1x40xf32, #tpu.memory_space<vmem>>, vector<1x40xf32>
    %13 = vector.broadcast %12 : vector<1x40xf32> to vector<8x40xf32>
    %14 = arith.addf %11, %13 : vector<8x40xf32>
    %15 = vector.extract_strided_slice %14 {offsets = [0, 0], sizes = [8, 20], strides = [1, 1]} : vector<8x40xf32> to vector<8x20xf32>
    %16 = vector.extract_strided_slice %14 {offsets = [0, 20], sizes = [8, 20], strides = [1, 1]} : vector<8x40xf32> to vector<8x20xf32>
    %c0_11 = arith.constant 0 : index
    %c0_12 = arith.constant 0 : index
    %17 = vector.load %arg2[%c0_11, %c0_12] : memref<8x20xf32, #tpu.memory_space<vmem>>, vector<8x20xf32>
    %cst_13 = arith.constant 5.000000e-01 : f32
    %18 = vector.broadcast %cst_13 : f32 to vector<8x20xf32>
    %19 = arith.mulf %18, %16 : vector<8x20xf32>
    %20 = math.exp %19 : vector<8x20xf32>
    %21 = arith.mulf %17, %20 : vector<8x20xf32>
    %22 = arith.addf %15, %21 : vector<8x20xf32>
    %23 = arith.truncf %22 : vector<8x20xf32> to vector<8x20xbf16>
    %c0_14 = arith.constant 0 : index
    %c0_15 = arith.constant 0 : index
    %24 = vector.load %arg7[%c0_14, %c0_15] : memref<20x400xbf16, #tpu.memory_space<vmem>>, vector<20x400xbf16>
    %cst_16 = arith.constant dense<0.000000e+00> : vector<8x400xf32>
    %25 = tpu.matmul %23, %24, %cst_16 {dimension_numbers = #tpu.dot_dimension_numbers<[1], [0], [0], [1], [0, 0, 1, 1], [], []>} : vector<8x20xbf16>, vector<20x400xbf16>, vector<8x400xf32> -> vector<8x400xf32>
    %c0_17 = arith.constant 0 : index
    %c0_18 = arith.constant 0 : index
    %26 = vector.load %arg8[%c0_17, %c0_18] : memref<1x400xf32, #tpu.memory_space<vmem>>, vector<1x400xf32>
    %27 = vector.broadcast %26 : vector<1x400xf32> to vector<8x400xf32>
    %28 = arith.addf %25, %27 : vector<8x400xf32>
    %cst_19 = arith.constant 0.000000e+00 : f32
    %29 = vector.broadcast %cst_19 : f32 to vector<8x400xf32>
    %30 = arith.maximumf %28, %29 : vector<8x400xf32>
    %31 = arith.truncf %30 : vector<8x400xf32> to vector<8x400xbf16>
    %c0_20 = arith.constant 0 : index
    %c0_21 = arith.constant 0 : index
    %32 = vector.load %arg9[%c0_20, %c0_21] : memref<400x784xbf16, #tpu.memory_space<vmem>>, vector<400x784xbf16>
    %cst_22 = arith.constant dense<0.000000e+00> : vector<8x784xf32>
    %33 = tpu.matmul %31, %32, %cst_22 {dimension_numbers = #tpu.dot_dimension_numbers<[1], [0], [0], [1], [0, 0, 1, 1], [], []>} : vector<8x400xbf16>, vector<400x784xbf16>, vector<8x784xf32> -> vector<8x784xf32>
    %c0_23 = arith.constant 0 : index
    %c0_24 = arith.constant 0 : index
    %34 = vector.load %arg10[%c0_23, %c0_24] : memref<1x784xf32, #tpu.memory_space<vmem>>, vector<1x784xf32>
    %35 = vector.broadcast %34 : vector<1x784xf32> to vector<8x784xf32>
    %36 = arith.addf %33, %35 : vector<8x784xf32>
    %37 = arith.negf %36 : vector<8x784xf32>
    %38 = math.exp %37 : vector<8x784xf32>
    %cst_25 = arith.constant 1.000000e+00 : f32
    %39 = vector.broadcast %cst_25 : f32 to vector<8x784xf32>
    %40 = arith.addf %39, %38 : vector<8x784xf32>
    %41 = arith.divf %39, %40 : vector<8x784xf32>
    %42 = arith.truncf %41 : vector<8x784xf32> to vector<8x784xbf16>
    %c0_26 = arith.constant 0 : index
    %c0_27 = arith.constant 0 : index
    %43 = vector.load %arg11[%c0_26, %c0_27] : memref<8x784xbf16, #tpu.memory_space<vmem>>, vector<8x784xbf16>
    tpu.vector_store %arg11[%c0_26, %c0_27], %42 {strides = array<i32>} : memref<8x784xbf16, #tpu.memory_space<vmem>>, vector<8x784xbf16>,
    %c0_28 = arith.constant 0 : index
    %c0_29 = arith.constant 0 : index
    %44 = vector.load %arg12[%c0_28, %c0_29] : memref<8x40xf32, #tpu.memory_space<vmem>>, vector<8x40xf32>
    tpu.vector_store %arg12[%c0_28, %c0_29], %14 {strides = array<i32>} : memref<8x40xf32, #tpu.memory_space<vmem>>, vector<8x40xf32>,
    return
  }
  func.func @transform_0(%arg0: i32) -> (i32, i32) {
    %c0_i32 = arith.constant 0 : i32
    %c0_i32_0 = arith.constant 0 : i32
    return %arg0, %c0_i32 : i32, i32
  }
  func.func @transform_1(%arg0: i32) -> (i32, i32) {
    %c0_i32 = arith.constant 0 : i32
    %c0_i32_0 = arith.constant 0 : i32
    return %arg0, %c0_i32 : i32, i32
  }
  func.func @transform_2(%arg0: i32) -> (i32, i32) {
    %c0_i32 = arith.constant 0 : i32
    %c0_i32_0 = arith.constant 0 : i32
    %c0_i32_1 = arith.constant 0 : i32
    return %c0_i32, %c0_i32_0 : i32, i32
  }
  func.func @transform_3(%arg0: i32) -> (i32, i32) {
    %c0_i32 = arith.constant 0 : i32
    %c0_i32_0 = arith.constant 0 : i32
    %c0_i32_1 = arith.constant 0 : i32
    return %c0_i32, %c0_i32_0 : i32, i32
  }
  func.func @transform_4(%arg0: i32) -> (i32, i32) {
    %c0_i32 = arith.constant 0 : i32
    %c0_i32_0 = arith.constant 0 : i32
    %c0_i32_1 = arith.constant 0 : i32
    return %c0_i32, %c0_i32_0 : i32, i32
  }
  func.func @transform_5(%arg0: i32) -> (i32, i32) {
    %c0_i32 = arith.constant 0 : i32
    %c0_i32_0 = arith.constant 0 : i32
    %c0_i32_1 = arith.constant 0 : i32
    return %c0_i32, %c0_i32_0 : i32, i32
  }
  func.func @transform_6(%arg0: i32) -> (i32, i32) {
    %c0_i32 = arith.constant 0 : i32
    %c0_i32_0 = arith.constant 0 : i32
    %c0_i32_1 = arith.constant 0 : i32
    return %c0_i32, %c0_i32_0 : i32, i32
  }
  func.func @transform_7(%arg0: i32) -> (i32, i32) {
    %c0_i32 = arith.constant 0 : i32
    %c0_i32_0 = arith.constant 0 : i32
    %c0_i32_1 = arith.constant 0 : i32
    return %c0_i32, %c0_i32_0 : i32, i32
  }
  func.func @transform_8(%arg0: i32) -> (i32, i32) {
    %c0_i32 = arith.constant 0 : i32
    %c0_i32_0 = arith.constant 0 : i32
    %c0_i32_1 = arith.constant 0 : i32
    return %c0_i32, %c0_i32_0 : i32, i32
  }
  func.func @transform_9(%arg0: i32) -> (i32, i32) {
    %c0_i32 = arith.constant 0 : i32
    %c0_i32_0 = arith.constant 0 : i32
    %c0_i32_1 = arith.constant 0 : i32
    return %c0_i32, %c0_i32_0 : i32, i32
  }
  func.func @transform_10(%arg0: i32) -> (i32, i32) {
    %c0_i32 = arith.constant 0 : i32
    %c0_i32_0 = arith.constant 0 : i32
    return %arg0, %c0_i32 : i32, i32
  }
  func.func @transform_11(%arg0: i32) -> (i32, i32) {
    %c0_i32 = arith.constant 0 : i32
    %c0_i32_0 = arith.constant 0 : i32
    return %arg0, %c0_i32 : i32, i32
  }
}

</mosaic_0001>

<llo_original>
// kernel: vae_forward.1
$region0: #{vae_forward.1}
  #allocation0 [shape = 'u32[]', space=smem, size = 0x4, offset = 0x4, fixed_abs, tag = 'smem constant byte address 0x4 - core index']
  #allocation1 [shape = 'u32[144,128]{1,0:T(1,128)}', space=vmem, size = 0x12000, scoped, tag = 'internal scratch']
  %s0 = inlined_call_operand.vmem [shape: f32[8,500], index: 0, kind: input, shape index: {}]
  %s1 = inlined_call_operand.vmem [shape: f32[8,20], index: 1, kind: input, shape index: {}]
  %s2 = inlined_call_operand.vmem [shape: bf16[500,400], index: 2, kind: input, shape index: {}]
  %s3 = inlined_call_operand.vmem [shape: f32[1,400], index: 3, kind: input, shape index: {}]
  %s4 = inlined_call_operand.vmem [shape: bf16[400,40], index: 4, kind: input, shape index: {}]
  %s5 = inlined_call_operand.vmem [shape: f32[1,40], index: 5, kind: input, shape index: {}]
  %s6 = inlined_call_operand.vmem [shape: bf16[20,400], index: 6, kind: input, shape index: {}]
  %s7 = inlined_call_operand.vmem [shape: f32[1,400], index: 7, kind: input, shape index: {}]
  %s8 = inlined_call_operand.vmem [shape: bf16[400,784], index: 8, kind: input, shape index: {}]
  %s9 = inlined_call_operand.vmem [shape: f32[1,784], index: 9, kind: input, shape index: {}]
  %s10 = inlined_call_operand.vmem [shape: bf16[8,784], index: 10, kind: output, shape index: {0}]
  %s11 = inlined_call_operand.vmem [shape: f32[8,40], index: 11, kind: output, shape index: {1}]
  %12 = xla_tuple %s10, %s11
  %s13 = sld [smem:[#allocation0]]
  $region58: #{vae_forward.1} parent=0
    _
  %s15 = ssub.s32 1, %s13
  %s16 = scalar_select 0, %s15, %s13
  // Predicated region
  $region2: #{vae_forward.1} parent=0 // pred_check
    _
  $region3: #{vae_forward.1} parent=0 // pred_check_branch
    %18 = sbr.rel (0) target = $region5
  $region4: #{vae_forward.1} parent=0 // pred_region
    _
  $region5: #{vae_forward.1} parent=0 // pred_fallthru
    _
  // Predicated region
  $region6: #{vae_forward.1} parent=0 // pred_check
    _
  $region7: #{vae_forward.1} parent=0 // pred_check_branch
    %20 = sbr.rel (0) target = $region9
  $region8: #{vae_forward.1} parent=0 // pred_region
    _
  $region9: #{vae_forward.1} parent=0 // pred_fallthru
    _
  // Predicated region
  $region10: #{vae_forward.1} parent=0 // pred_check
    _
  $region11: #{vae_forward.1} parent=0 // pred_check_branch
    %22 = sbr.rel (0) target = $region13
  $region12: #{vae_forward.1} parent=0 // pred_region
    _
  $region13: #{vae_forward.1} parent=0 // pred_fallthru
    _
  // Predicated region
  $region14: #{vae_forward.1} parent=0 // pred_check
    _
  $region15: #{vae_forward.1} parent=0 // pred_check_branch
    %24 = sbr.rel (0) target = $region17
  $region16: #{vae_forward.1} parent=0 // pred_region
    _
  $region17: #{vae_forward.1} parent=0 // pred_fallthru
    _
  // Predicated region
  $region18: #{vae_forward.1} parent=0 // pred_check
    _
  $region19: #{vae_forward.1} parent=0 // pred_check_branch
    %26 = sbr.rel (0) target = $region21
  $region20: #{vae_forward.1} parent=0 // pred_region
    _
  $region21: #{vae_forward.1} parent=0 // pred_fallthru
    _
  // Predicated region
  $region22: #{vae_forward.1} parent=0 // pred_check
    _
  $region23: #{vae_forward.1} parent=0 // pred_check_branch
    %28 = sbr.rel (0) target = $region25
  $region24: #{vae_forward.1} parent=0 // pred_region
    _
  $region25: #{vae_forward.1} parent=0 // pred_fallthru
    _
  // Predicated region
  $region26: #{vae_forward.1} parent=0 // pred_check
    _
  $region27: #{vae_forward.1} parent=0 // pred_check_branch
    %30 = sbr.rel (0) target = $region29
  $region28: #{vae_forward.1} parent=0 // pred_region
    _
  $region29: #{vae_forward.1} parent=0 // pred_fallthru
    _
  // Predicated region
  $region30: #{vae_forward.1} parent=0 // pred_check
    _
  $region31: #{vae_forward.1} parent=0 // pred_check_branch
    %32 = sbr.rel (0) target = $region33
  $region32: #{vae_forward.1} parent=0 // pred_region
    _
  $region33: #{vae_forward.1} parent=0 // pred_fallthru
    _
  // Predicated region
  $region34: #{vae_forward.1} parent=0 // pred_check
    _
  $region35: #{vae_forward.1} parent=0 // pred_check_branch
    %34 = sbr.rel (0) target = $region37
  $region36: #{vae_forward.1} parent=0 // pred_region
    _
  $region37: #{vae_forward.1} parent=0 // pred_fallthru
    _
  // Predicated region
  $region38: #{vae_forward.1} parent=0 // pred_check
    _
  $region39: #{vae_forward.1} parent=0 // pred_check_branch
    %36 = sbr.rel (0) target = $region41
  $region40: #{vae_forward.1} parent=0 // pred_region
    _
  $region41: #{vae_forward.1} parent=0 // pred_fallthru
    _
  %v38 = vld [vmem:[%s0] sm:$0xff]
  %v39 = vld [vmem:[%s0 + $0x8] sm:$0xff]
  %v40 = vld [vmem:[%s0 + $0x10] sm:$0xff]
  %v41 = vld [vmem:[%s0 + $0x18] sm:$0xff]
  %v42 = vpack.c.bf16 %v38, %v38
  %v43 = vpack.c.bf16 %v39, %v39
  %v44 = vpack.c.bf16 %v40, %v40
  %v45 = vpack.c.bf16 %v41, %v41
  %v46 = vld [vmem:[%s2] sm:$0xff]
  %v47 = vld [vmem:[%s2 + $0x8] sm:$0xff]
  %v48 = vld [vmem:[%s2 + $0x10] sm:$0xff]
  %v49 = vld [vmem:[%s2 + $0x18] sm:$0xff]
  %v50 = vld [vmem:[%s2 + $0x20] sm:$0xff]
  %v51 = vld [vmem:[%s2 + $0x28] sm:$0xff]
  %v52 = vld [vmem:[%s2 + $0x30] sm:$0xff]
  %v53 = vld [vmem:[%s2 + $0x38] sm:$0xff]
  %v54 = vld [vmem:[%s2 + $0x40] sm:$0xff]
  %v55 = vld [vmem:[%s2 + $0x48] sm:$0xff]
  %v56 = vld [vmem:[%s2 + $0x50] sm:$0xff]
  %v57 = vld [vmem:[%s2 + $0x58] sm:$0xff]
  %v58 = vld [vmem:[%s2 + $0x60] sm:$0xff]
  %v59 = vld [vmem:[%s2 + $0x68] sm:$0xff]
  %v60 = vld [vmem:[%s2 + $0x70] sm:$0xff]
  %v61 = vld [vmem:[%s2 + $0x78] sm:$0xff]
  %v62 = vld [vmem:[%s2 + $0x80] sm:$0xff]
  %v63 = vld [vmem:[%s2 + $0x88] sm:$0xff]
  %v64 = vld [vmem:[%s2 + $0x90] sm:$0xff]
  %v65 = vld [vmem:[%s2 + $0x98] sm:$0xff]
  %v66 = vld [vmem:[%s2 + $0xa0] sm:$0xff]
  %v67 = vld [vmem:[%s2 + $0xa8] sm:$0xff]
  %v68 = vld [vmem:[%s2 + $0xb0] sm:$0xff]
  %v69 = vld [vmem:[%s2 + $0xb8] sm:$0xff]
  %v70 = vld [vmem:[%s2 + $0xc0] sm:$0xff]
  %v71 = vld [vmem:[%s2 + $0xc8] sm:$0xff]
  %v72 = vld [vmem:[%s2 + $0xd0] sm:$0xff]
  %v73 = vld [vmem:[%s2 + $0xd8] sm:$0xff]
  %v74 = vld [vmem:[%s2 + $0xe0] sm:$0xff]
  %v75 = vld [vmem:[%s2 + $0xe8] sm:$0xff]
  %v76 = vld [vmem:[%s2 + $0xf0] sm:$0xff]
  %v77 = vld [vmem:[%s2 + $0xf8] sm:$0xff]
  %v78 = vld [vmem:[%s2 + $0x100] sm:$0xff]
  %v79 = vld [vmem:[%s2 + $0x108] sm:$0xff]
  %v80 = vld [vmem:[%s2 + $0x110] sm:$0xff]
  %v81 = vld [vmem:[%s2 + $0x118] sm:$0xff]
  %v82 = vld [vmem:[%s2 + $0x120] sm:$0xff]
  %v83 = vld [vmem:[%s2 + $0x128] sm:$0xff]
  %v84 = vld [vmem:[%s2 + $0x130] sm:$0xff]
  %v85 = vld [vmem:[%s2 + $0x138] sm:$0xff]
  %v86 = vld [vmem:[%s2 + $0x140] sm:$0xff]
  %v87 = vld [vmem:[%s2 + $0x148] sm:$0xff]
  %v88 = vld [vmem:[%s2 + $0x150] sm:$0xff]
  %v89 = vld [vmem:[%s2 + $0x158] sm:$0xff]
  %v90 = vld [vmem:[%s2 + $0x160] sm:$0xff]
  %v91 = vld [vmem:[%s2 + $0x168] sm:$0xff]
  %v92 = vld [vmem:[%s2 + $0x170] sm:$0xff]
  %v93 = vld [vmem:[%s2 + $0x178] sm:$0xff]
  %v94 = vld [vmem:[%s2 + $0x180] sm:$0xff]
  %v95 = vld [vmem:[%s2 + $0x188] sm:$0xff]
  %v96 = vld [vmem:[%s2 + $0x190] sm:$0xff]
  %v97 = vld [vmem:[%s2 + $0x198] sm:$0xff]
  %v98 = vld [vmem:[%s2 + $0x1a0] sm:$0xff]
  %v99 = vld [vmem:[%s2 + $0x1a8] sm:$0xff]
  %v100 = vld [vmem:[%s2 + $0x1b0] sm:$0xff]
  %v101 = vld [vmem:[%s2 + $0x1b8] sm:$0xff]
  %v102 = vld [vmem:[%s2 + $0x1c0] sm:$0xff]
  %v103 = vld [vmem:[%s2 + $0x1c8] sm:$0xff]
  %v104 = vld [vmem:[%s2 + $0x1d0] sm:$0xff]
  %v105 = vld [vmem:[%s2 + $0x1d8] sm:$0xff]
  %v106 = vld [vmem:[%s2 + $0x1e0] sm:$0xff]
  %v107 = vld [vmem:[%s2 + $0x1e8] sm:$0xff]
  %v108 = vld [vmem:[%s2 + $0x1f0] sm:$0xff]
  %v109 = vld [vmem:[%s2 + $0x1f8] sm:$0xff]
  %v110 = vld [vmem:[%s2 + $0x200] sm:$0xff]
  %v111 = vld [vmem:[%s2 + $0x208] sm:$0xff]
  %v112 = vld [vmem:[%s2 + $0x210] sm:$0xff]
  %v113 = vld [vmem:[%s2 + $0x218] sm:$0xff]
  %v114 = vld [vmem:[%s2 + $0x220] sm:$0xff]
  %v115 = vld [vmem:[%s2 + $0x228] sm:$0xff]
  %v116 = vld [vmem:[%s2 + $0x230] sm:$0xff]
  %v117 = vld [vmem:[%s2 + $0x238] sm:$0xff]
  %v118 = vld [vmem:[%s2 + $0x240] sm:$0xff]
  %v119 = vld [vmem:[%s2 + $0x248] sm:$0xff]
  %v120 = vld [vmem:[%s2 + $0x250] sm:$0xff]
  %v121 = vld [vmem:[%s2 + $0x258] sm:$0xff]
  %v122 = vld [vmem:[%s2 + $0x260] sm:$0xff]
  %v123 = vld [vmem:[%s2 + $0x268] sm:$0xff]
  %v124 = vld [vmem:[%s2 + $0x270] sm:$0xff]
  %v125 = vld [vmem:[%s2 + $0x278] sm:$0xff]
  %v126 = vld [vmem:[%s2 + $0x280] sm:$0xff]
  %v127 = vld [vmem:[%s2 + $0x288] sm:$0xff]
  %v128 = vld [vmem:[%s2 + $0x290] sm:$0xff]
  %v129 = vld [vmem:[%s2 + $0x298] sm:$0xff]
  %v130 = vld [vmem:[%s2 + $0x2a0] sm:$0xff]
  %v131 = vld [vmem:[%s2 + $0x2a8] sm:$0xff]
  %v132 = vld [vmem:[%s2 + $0x2b0] sm:$0xff]
  %v133 = vld [vmem:[%s2 + $0x2b8] sm:$0xff]
  %v134 = vld [vmem:[%s2 + $0x2c0] sm:$0xff]
  %v135 = vld [vmem:[%s2 + $0x2c8] sm:$0xff]
  %v136 = vld [vmem:[%s2 + $0x2d0] sm:$0xff]
  %v137 = vld [vmem:[%s2 + $0x2d8] sm:$0xff]
  %v138 = vld [vmem:[%s2 + $0x2e0] sm:$0xff]
  %v139 = vld [vmem:[%s2 + $0x2e8] sm:$0xff]
  %v140 = vld [vmem:[%s2 + $0x2f0] sm:$0xff]
  %v141 = vld [vmem:[%s2 + $0x2f8] sm:$0xff]
  %v142 = vld [vmem:[%s2 + $0x300] sm:$0xff]
  %v143 = vld [vmem:[%s2 + $0x308] sm:$0xff]
  %v144 = vld [vmem:[%s2 + $0x310] sm:$0xff]
  %v145 = vld [vmem:[%s2 + $0x318] sm:$0xff]
  %v146 = vld [vmem:[%s2 + $0x320] sm:$0xff]
  %v147 = vld [vmem:[%s2 + $0x328] sm:$0xff]
  %v148 = vld [vmem:[%s2 + $0x330] sm:$0xff]
  %v149 = vld [vmem:[%s2 + $0x338] sm:$0xff]
  %v150 = vld [vmem:[%s2 + $0x340] sm:$0xff]
  %v151 = vld [vmem:[%s2 + $0x348] sm:$0xff]
  %v152 = vld [vmem:[%s2 + $0x350] sm:$0xff]
  %v153 = vld [vmem:[%s2 + $0x358] sm:$0xff]
  %v154 = vld [vmem:[%s2 + $0x360] sm:$0xff]
  %v155 = vld [vmem:[%s2 + $0x368] sm:$0xff]
  %v156 = vld [vmem:[%s2 + $0x370] sm:$0xff]
  %v157 = vld [vmem:[%s2 + $0x378] sm:$0xff]
  %v158 = vld [vmem:[%s2 + $0x380] sm:$0xff]
  %v159 = vld [vmem:[%s2 + $0x388] sm:$0xff]
  %v160 = vld [vmem:[%s2 + $0x390] sm:$0xff]
  %v161 = vld [vmem:[%s2 + $0x398] sm:$0xff]
  %v162 = vld [vmem:[%s2 + $0x3a0] sm:$0xff]
  %v163 = vld [vmem:[%s2 + $0x3a8] sm:$0xff]
  %v164 = vld [vmem:[%s2 + $0x3b0] sm:$0xff]
  %v165 = vld [vmem:[%s2 + $0x3b8] sm:$0xff]
  %v166 = vld [vmem:[%s2 + $0x3c0] sm:$0xff]
  %v167 = vld [vmem:[%s2 + $0x3c8] sm:$0xff]
  %v168 = vld [vmem:[%s2 + $0x3d0] sm:$0xff]
  %v169 = vld [vmem:[%s2 + $0x3d8] sm:$0xff]
  %v170 = vld [vmem:[%s2 + $0x3e0] sm:$0x33]
  %v171 = vld [vmem:[%s2 + $0x3e8] sm:$0x33]
  %v172 = vld [vmem:[%s3] sm:$0xf]
  %v174 = vlaneseq
  %v175 = vshrl.u32 %v174, 7
  %v176 = vsub.s32 0, %v175
  %v177 = vrot.slane %v172, %v176
  %v178 = vlaneseq
  %v179 = vshrl.u32 %v178, 7
  %v180 = vsub.s32 1, %v179
  %v181 = vrot.slane %v172, %v180
  %v182 = vlaneseq
  %v183 = vshrl.u32 %v182, 7
  %v184 = vsub.s32 2, %v183
  %v185 = vrot.slane %v172, %v184
  %v186 = vlaneseq
  %v187 = vshrl.u32 %v186, 7
  %v188 = vsub.s32 3, %v187
  %v189 = vrot.slane %v172, %v188
  %v320 = vunpack.c.l.b16 %v46
  %v321 = vunpack.c.h.b16 %v46
  %v322 = vunpack.c.l.b16 %v47
  %v323 = vunpack.c.h.b16 %v47
  %v324 = vunpack.c.l.b16 %v48
  %v325 = vunpack.c.h.b16 %v48
  %v326 = vunpack.c.l.b16 %v49
  %v327 = vunpack.c.h.b16 %v49
  %v328 = vunpack.c.l.b16 %v50
  %v329 = vunpack.c.h.b16 %v50
  %v330 = vunpack.c.l.b16 %v51
  %v331 = vunpack.c.h.b16 %v51
  %v332 = vunpack.c.l.b16 %v52
  %v333 = vunpack.c.h.b16 %v52
  %v334 = vunpack.c.l.b16 %v53
  %v335 = vunpack.c.h.b16 %v53
  %v336 = vunpack.c.l.b16 %v54
  %v337 = vunpack.c.h.b16 %v54
  %v338 = vunpack.c.l.b16 %v55
  %v339 = vunpack.c.h.b16 %v55
  %v340 = vunpack.c.l.b16 %v56
  %v341 = vunpack.c.h.b16 %v56
  %v342 = vunpack.c.l.b16 %v57
  %v343 = vunpack.c.h.b16 %v57
  %v344 = vunpack.c.l.b16 %v58
  %v345 = vunpack.c.h.b16 %v58
  %v346 = vunpack.c.l.b16 %v59
  %v347 = vunpack.c.h.b16 %v59
  %v348 = vunpack.c.l.b16 %v60
  %v349 = vunpack.c.h.b16 %v60
  %v350 = vunpack.c.l.b16 %v61
  %v351 = vunpack.c.h.b16 %v61
  %v352 = vunpack.c.l.b16 %v62
  %v353 = vunpack.c.h.b16 %v62
  %v354 = vunpack.c.l.b16 %v63
  %v355 = vunpack.c.h.b16 %v63
  %v356 = vunpack.c.l.b16 %v64
  %v357 = vunpack.c.h.b16 %v64
  %v358 = vunpack.c.l.b16 %v65
  %v359 = vunpack.c.h.b16 %v65
  %v360 = vunpack.c.l.b16 %v66
  %v361 = vunpack.c.h.b16 %v66
  %v362 = vunpack.c.l.b16 %v67
  %v363 = vunpack.c.h.b16 %v67
  %v364 = vunpack.c.l.b16 %v68
  %v365 = vunpack.c.h.b16 %v68
  %v366 = vunpack.c.l.b16 %v69
  %v367 = vunpack.c.h.b16 %v69
  %v368 = vunpack.c.l.b16 %v70
  %v369 = vunpack.c.h.b16 %v70
  %v370 = vunpack.c.l.b16 %v71
  %v371 = vunpack.c.h.b16 %v71
  %v372 = vunpack.c.l.b16 %v72
  %v373 = vunpack.c.h.b16 %v72
  %v374 = vunpack.c.l.b16 %v73
  %v375 = vunpack.c.h.b16 %v73
  %v376 = vunpack.c.l.b16 %v74
  %v377 = vunpack.c.h.b16 %v74
  %v378 = vunpack.c.l.b16 %v75
  %v379 = vunpack.c.h.b16 %v75
  %v380 = vunpack.c.l.b16 %v76
  %v381 = vunpack.c.h.b16 %v76
  %v382 = vunpack.c.l.b16 %v77
  %v383 = vunpack.c.h.b16 %v77
  %v384 = vunpack.c.l.b16 %v78
  %v385 = vunpack.c.h.b16 %v78
  %v386 = vunpack.c.l.b16 %v79
  %v387 = vunpack.c.h.b16 %v79
  %v388 = vunpack.c.l.b16 %v80
  %v389 = vunpack.c.h.b16 %v80
  %v390 = vunpack.c.l.b16 %v81
  %v391 = vunpack.c.h.b16 %v81
  %v392 = vunpack.c.l.b16 %v82
  %v393 = vunpack.c.h.b16 %v82
  %v394 = vunpack.c.l.b16 %v83
  %v395 = vunpack.c.h.b16 %v83
  %v396 = vunpack.c.l.b16 %v84
  %v397 = vunpack.c.h.b16 %v84
  %v398 = vunpack.c.l.b16 %v85
  %v399 = vunpack.c.h.b16 %v85
  %v400 = vunpack.c.l.b16 %v86
  %v401 = vunpack.c.h.b16 %v86
  %v402 = vunpack.c.l.b16 %v87
  %v403 = vunpack.c.h.b16 %v87
  %v404 = vunpack.c.l.b16 %v88
  %v405 = vunpack.c.h.b16 %v88
  %v406 = vunpack.c.l.b16 %v89
  %v407 = vunpack.c.h.b16 %v89
  %v408 = vunpack.c.l.b16 %v90
  %v409 = vunpack.c.h.b16 %v90
  %v410 = vunpack.c.l.b16 %v91
  %v411 = vunpack.c.h.b16 %v91
  %v412 = vunpack.c.l.b16 %v92
  %v413 = vunpack.c.h.b16 %v92
  %v414 = vunpack.c.l.b16 %v93
  %v415 = vunpack.c.h.b16 %v93
  %v416 = vunpack.c.l.b16 %v94
  %v417 = vunpack.c.h.b16 %v94
  %v418 = vunpack.c.l.b16 %v95
  %v419 = vunpack.c.h.b16 %v95
  %v420 = vunpack.c.l.b16 %v96
  %v421 = vunpack.c.h.b16 %v96
  %v422 = vunpack.c.l.b16 %v97
  %v423 = vunpack.c.h.b16 %v97
  %v424 = vunpack.c.l.b16 %v98
  %v425 = vunpack.c.h.b16 %v98
  %v426 = vunpack.c.l.b16 %v99
  %v427 = vunpack.c.h.b16 %v99
  %v428 = vunpack.c.l.b16 %v100
  %v429 = vunpack.c.h.b16 %v100
  %v430 = vunpack.c.l.b16 %v101
  %v431 = vunpack.c.h.b16 %v101
  %v432 = vunpack.c.l.b16 %v102
  %v433 = vunpack.c.h.b16 %v102
  %v434 = vunpack.c.l.b16 %v103
  %v435 = vunpack.c.h.b16 %v103
  %v436 = vunpack.c.l.b16 %v104
  %v437 = vunpack.c.h.b16 %v104
  %v438 = vunpack.c.l.b16 %v105
  %v439 = vunpack.c.h.b16 %v105
  %v440 = vunpack.c.l.b16 %v106
  %v441 = vunpack.c.h.b16 %v106
  %v442 = vunpack.c.l.b16 %v107
  %v443 = vunpack.c.h.b16 %v107
  %v444 = vunpack.c.l.b16 %v108
  %v445 = vunpack.c.h.b16 %v108
  %v446 = vunpack.c.l.b16 %v109
  %v447 = vunpack.c.h.b16 %v109
  %v448 = vunpack.c.l.b16 %v110
  %v449 = vunpack.c.h.b16 %v110
  %v450 = vunpack.c.l.b16 %v111
  %v451 = vunpack.c.h.b16 %v111
  %v452 = vunpack.c.l.b16 %v112
  %v453 = vunpack.c.h.b16 %v112
  %v454 = vunpack.c.l.b16 %v113
  %v455 = vunpack.c.h.b16 %v113
  %v456 = vunpack.c.l.b16 %v114
  %v457 = vunpack.c.h.b16 %v114
  %v458 = vunpack.c.l.b16 %v115
  %v459 = vunpack.c.h.b16 %v115
  %v460 = vunpack.c.l.b16 %v116
  %v461 = vunpack.c.h.b16 %v116
  %v462 = vunpack.c.l.b16 %v117
  %v463 = vunpack.c.h.b16 %v117
  %v464 = vunpack.c.l.b16 %v118
  %v465 = vunpack.c.h.b16 %v118
  %v466 = vunpack.c.l.b16 %v119
  %v467 = vunpack.c.h.b16 %v119
  %v468 = vunpack.c.l.b16 %v120
  %v469 = vunpack.c.h.b16 %v120
  %v470 = vunpack.c.l.b16 %v121
  %v471 = vunpack.c.h.b16 %v121
  %v472 = vunpack.c.l.b16 %v122
  %v473 = vunpack.c.h.b16 %v122
  %v474 = vunpack.c.l.b16 %v123
  %v475 = vunpack.c.h.b16 %v123
  %v476 = vunpack.c.l.b16 %v124
  %v477 = vunpack.c.h.b16 %v124
  %v478 = vunpack.c.l.b16 %v125
  %v479 = vunpack.c.h.b16 %v125
  %v480 = vunpack.c.l.b16 %v126
  %v481 = vunpack.c.h.b16 %v126
  %v482 = vunpack.c.l.b16 %v127
  %v483 = vunpack.c.h.b16 %v127
  %v484 = vunpack.c.l.b16 %v128
  %v485 = vunpack.c.h.b16 %v128
  %v486 = vunpack.c.l.b16 %v129
  %v487 = vunpack.c.h.b16 %v129
  %v488 = vunpack.c.l.b16 %v130
  %v489 = vunpack.c.h.b16 %v130
  %v490 = vunpack.c.l.b16 %v131
  %v491 = vunpack.c.h.b16 %v131
  %v492 = vunpack.c.l.b16 %v132
  %v493 = vunpack.c.h.b16 %v132
  %v494 = vunpack.c.l.b16 %v133
  %v495 = vunpack.c.h.b16 %v133
  %v496 = vunpack.c.l.b16 %v134
  %v497 = vunpack.c.h.b16 %v134
  %v498 = vunpack.c.l.b16 %v135
  %v499 = vunpack.c.h.b16 %v135
  %v500 = vunpack.c.l.b16 %v136
  %v501 = vunpack.c.h.b16 %v136
  %v502 = vunpack.c.l.b16 %v137
  %v503 = vunpack.c.h.b16 %v137
  %v504 = vunpack.c.l.b16 %v138
  %v505 = vunpack.c.h.b16 %v138
  %v506 = vunpack.c.l.b16 %v139
  %v507 = vunpack.c.h.b16 %v139
  %v508 = vunpack.c.l.b16 %v140
  %v509 = vunpack.c.h.b16 %v140
  %v510 = vunpack.c.l.b16 %v141
  %v511 = vunpack.c.h.b16 %v141
  %v512 = vunpack.c.l.b16 %v142
  %v513 = vunpack.c.h.b16 %v142
  %v514 = vunpack.c.l.b16 %v143
  %v515 = vunpack.c.h.b16 %v143
  %v516 = vunpack.c.l.b16 %v144
  %v517 = vunpack.c.h.b16 %v144
  %v518 = vunpack.c.l.b16 %v145
  %v519 = vunpack.c.h.b16 %v145
  %v520 = vunpack.c.l.b16 %v146
  %v521 = vunpack.c.h.b16 %v146
  %v522 = vunpack.c.l.b16 %v147
  %v523 = vunpack.c.h.b16 %v147
  %v524 = vunpack.c.l.b16 %v148
  %v525 = vunpack.c.h.b16 %v148
  %v526 = vunpack.c.l.b16 %v149
  %v527 = vunpack.c.h.b16 %v149
  %v528 = vunpack.c.l.b16 %v150
  %v529 = vunpack.c.h.b16 %v150
  %v530 = vunpack.c.l.b16 %v151
  %v531 = vunpack.c.h.b16 %v151
  %v532 = vunpack.c.l.b16 %v152
  %v533 = vunpack.c.h.b16 %v152
  %v534 = vunpack.c.l.b16 %v153
  %v535 = vunpack.c.h.b16 %v153
  %v536 = vunpack.c.l.b16 %v154
  %v537 = vunpack.c.h.b16 %v154
  %v538 = vunpack.c.l.b16 %v155
  %v539 = vunpack.c.h.b16 %v155
  %v540 = vunpack.c.l.b16 %v156
  %v541 = vunpack.c.h.b16 %v156
  %v542 = vunpack.c.l.b16 %v157
  %v543 = vunpack.c.h.b16 %v157
  %v544 = vunpack.c.l.b16 %v158
  %v545 = vunpack.c.h.b16 %v158
  %v546 = vunpack.c.l.b16 %v159
  %v547 = vunpack.c.h.b16 %v159
  %v548 = vunpack.c.l.b16 %v160
  %v549 = vunpack.c.h.b16 %v160
  %v550 = vunpack.c.l.b16 %v161
  %v551 = vunpack.c.h.b16 %v161
  %v552 = vunpack.c.l.b16 %v162
  %v553 = vunpack.c.h.b16 %v162
  %v554 = vunpack.c.l.b16 %v163
  %v555 = vunpack.c.h.b16 %v163
  %v556 = vunpack.c.l.b16 %v164
  %v557 = vunpack.c.h.b16 %v164
  %v558 = vunpack.c.l.b16 %v165
  %v559 = vunpack.c.h.b16 %v165
  %v560 = vunpack.c.l.b16 %v166
  %v561 = vunpack.c.h.b16 %v166
  %v562 = vunpack.c.l.b16 %v167
  %v563 = vunpack.c.h.b16 %v167
  %v564 = vunpack.c.l.b16 %v168
  %v565 = vunpack.c.h.b16 %v168
  %v566 = vunpack.c.l.b16 %v169
  %v567 = vunpack.c.h.b16 %v169
  %v568 = vunpack.c.l.b16 %v170
  %v569 = vunpack.c.h.b16 %v170
  %v570 = vunpack.c.l.b16 %v171
  %v571 = vunpack.c.h.b16 %v171
  %v572 = vpack.c.b16 %v324, %v320
  %v573 = vpack.c.b16 %v325, %v321
  %v574 = vpack.c.b16 %v326, %v322
  %v575 = vpack.c.b16 %v327, %v323
  %v576 = vpack.c.b16 %v332, %v328
  %v577 = vpack.c.b16 %v333, %v329
  %v578 = vpack.c.b16 %v334, %v330
  %v579 = vpack.c.b16 %v335, %v331
  %v580 = vpack.c.b16 %v340, %v336
  %v581 = vpack.c.b16 %v341, %v337
  %v582 = vpack.c.b16 %v342, %v338
  %v583 = vpack.c.b16 %v343, %v339
  %v584 = vpack.c.b16 %v348, %v344
  %v585 = vpack.c.b16 %v349, %v345
  %v586 = vpack.c.b16 %v350, %v346
  %v587 = vpack.c.b16 %v351, %v347
  %v588 = vpack.c.b16 %v356, %v352
  %v589 = vpack.c.b16 %v357, %v353
  %v590 = vpack.c.b16 %v358, %v354
  %v591 = vpack.c.b16 %v359, %v355
  %v592 = vpack.c.b16 %v364, %v360
  %v593 = vpack.c.b16 %v365, %v361
  %v594 = vpack.c.b16 %v366, %v362
  %v595 = vpack.c.b16 %v367, %v363
  %v596 = vpack.c.b16 %v372, %v368
  %v597 = vpack.c.b16 %v373, %v369
  %v598 = vpack.c.b16 %v374, %v370
  %v599 = vpack.c.b16 %v375, %v371
  %v600 = vpack.c.b16 %v380, %v376
  %v601 = vpack.c.b16 %v381, %v377
  %v602 = vpack.c.b16 %v382, %v378
  %v603 = vpack.c.b16 %v383, %v379
  %v604 = vpack.c.b16 %v388, %v384
  %v605 = vpack.c.b16 %v389, %v385
  %v606 = vpack.c.b16 %v390, %v386
  %v607 = vpack.c.b16 %v391, %v387
  %v608 = vpack.c.b16 %v396, %v392
  %v609 = vpack.c.b16 %v397, %v393
  %v610 = vpack.c.b16 %v398, %v394
  %v611 = vpack.c.b16 %v399, %v395
  %v612 = vpack.c.b16 %v404, %v400
  %v613 = vpack.c.b16 %v405, %v401
  %v614 = vpack.c.b16 %v406, %v402
  %v615 = vpack.c.b16 %v407, %v403
  %v616 = vpack.c.b16 %v412, %v408
  %v617 = vpack.c.b16 %v413, %v409
  %v618 = vpack.c.b16 %v414, %v410
  %v619 = vpack.c.b16 %v415, %v411
  %v620 = vpack.c.b16 %v420, %v416
  %v621 = vpack.c.b16 %v421, %v417
  %v622 = vpack.c.b16 %v422, %v418
  %v623 = vpack.c.b16 %v423, %v419
  %v624 = vpack.c.b16 %v428, %v424
  %v625 = vpack.c.b16 %v429, %v425
  %v626 = vpack.c.b16 %v430, %v426
  %v627 = vpack.c.b16 %v431, %v427
  %v628 = vpack.c.b16 %v436, %v432
  %v629 = vpack.c.b16 %v437, %v433
  %v630 = vpack.c.b16 %v438, %v434
  %v631 = vpack.c.b16 %v439, %v435
  %v632 = vpack.c.b16 %v444, %v440
  %v633 = vpack.c.b16 %v445, %v441
  %v634 = vpack.c.b16 %v446, %v442
  %v635 = vpack.c.b16 %v447, %v443
  %v636 = vpack.c.b16 %v452, %v448
  %v637 = vpack.c.b16 %v453, %v449
  %v638 = vpack.c.b16 %v454, %v450
  %v639 = vpack.c.b16 %v455, %v451
  %v640 = vpack.c.b16 %v460, %v456
  %v641 = vpack.c.b16 %v461, %v457
  %v642 = vpack.c.b16 %v462, %v458
  %v643 = vpack.c.b16 %v463, %v459
  %v644 = vpack.c.b16 %v468, %v464
  %v645 = vpack.c.b16 %v469, %v465
  %v646 = vpack.c.b16 %v470, %v466
  %v647 = vpack.c.b16 %v471, %v467
  %v648 = vpack.c.b16 %v476, %v472
  %v649 = vpack.c.b16 %v477, %v473
  %v650 = vpack.c.b16 %v478, %v474
  %v651 = vpack.c.b16 %v479, %v475
  %v652 = vpack.c.b16 %v484, %v480
  %v653 = vpack.c.b16 %v485, %v481
  %v654 = vpack.c.b16 %v486, %v482
  %v655 = vpack.c.b16 %v487, %v483
  %v656 = vpack.c.b16 %v492, %v488
  %v657 = vpack.c.b16 %v493, %v489
  %v658 = vpack.c.b16 %v494, %v490
  %v659 = vpack.c.b16 %v495, %v491
  %v660 = vpack.c.b16 %v500, %v496
  %v661 = vpack.c.b16 %v501, %v497
  %v662 = vpack.c.b16 %v502, %v498
  %v663 = vpack.c.b16 %v503, %v499
  %v664 = vpack.c.b16 %v508, %v504
  %v665 = vpack.c.b16 %v509, %v505
  %v666 = vpack.c.b16 %v510, %v506
  %v667 = vpack.c.b16 %v511, %v507
  %v668 = vpack.c.b16 %v516, %v512
  %v669 = vpack.c.b16 %v517, %v513
  %v670 = vpack.c.b16 %v518, %v514
  %v671 = vpack.c.b16 %v519, %v515
  %v672 = vpack.c.b16 %v524, %v520
  %v673 = vpack.c.b16 %v525, %v521
  %v674 = vpack.c.b16 %v526, %v522
  %v675 = vpack.c.b16 %v527, %v523
  %v676 = vpack.c.b16 %v532, %v528
  %v677 = vpack.c.b16 %v533, %v529
  %v678 = vpack.c.b16 %v534, %v530
  %v679 = vpack.c.b16 %v535, %v531
  %v680 = vpack.c.b16 %v540, %v536
  %v681 = vpack.c.b16 %v541, %v537
  %v682 = vpack.c.b16 %v542, %v538
  %v683 = vpack.c.b16 %v543, %v539
  %v684 = vpack.c.b16 %v548, %v544
  %v685 = vpack.c.b16 %v549, %v545
  %v686 = vpack.c.b16 %v550, %v546
  %v687 = vpack.c.b16 %v551, %v547
  %v688 = vpack.c.b16 %v556, %v552
  %v689 = vpack.c.b16 %v557, %v553
  %v690 = vpack.c.b16 %v558, %v554
  %v691 = vpack.c.b16 %v559, %v555
  %v692 = vpack.c.b16 %v564, %v560
  %v693 = vpack.c.b16 %v565, %v561
  %v694 = vpack.c.b16 %v566, %v562
  %v695 = vpack.c.b16 %v567, %v563
  %v696 = vpack.c.b16 %v568, %v568
  %v697 = vpack.c.b16 %v569, %v569
  %v698 = vpack.c.b16 %v570, %v570
  %v699 = vpack.c.b16 %v571, %v571
  %vm824 = vcmask 949248
  %v826 = vsel %vm824, %v45, 0
  %vm828 = vcmask 1041408
  %v830 = vsel %vm828, %v696, 0
  %v833 = vsel %vm828, %v697, 0
  %v836 = vsel %vm828, %v698, 0
  %v839 = vsel %vm828, %v699, 0
  %841 = vmatprep.subr.bf16.mxu0 %v601
  %842 = vmatpush1.bf16.msra.mxu0 %v600
  %843 = vmatprep.subr.bf16.mxu0 %v597
  %844 = vmatpush1.bf16.msra.mxu0 %v596
  %845 = vmatprep.subr.bf16.mxu0 %v593
  %846 = vmatpush1.bf16.msra.mxu0 %v592
  %847 = vmatprep.subr.bf16.mxu0 %v589
  %848 = vmatpush1.bf16.msra.mxu0 %v588
  %849 = vmatprep.subr.bf16.mxu0 %v585
  %850 = vmatpush1.bf16.msra.mxu0 %v584
  %851 = vmatprep.subr.bf16.mxu0 %v581
  %852 = vmatpush1.bf16.msra.mxu0 %v580
  %853 = vmatprep.subr.bf16.mxu0 %v577
  %854 = vmatpush1.bf16.msra.mxu0 %v576
  %855 = vmatprep.subr.bf16.mxu0 %v573
  %856 = vmatpush1.bf16.msra.mxu0 %v572
  %857 = vmatprep.subr.bf16.mxu0 %v633
  %858 = vmatpush2.bf16.msra.mxu0 %v632
  %859 = vmatprep.subr.bf16.mxu0 %v629
  %860 = vmatpush2.bf16.msra.mxu0 %v628
  %861 = vmatprep.subr.bf16.mxu0 %v625
  %862 = vmatpush2.bf16.msra.mxu0 %v624
  %863 = vmatprep.subr.bf16.mxu0 %v621
  %864 = vmatpush2.bf16.msra.mxu0 %v620
  %865 = vmatprep.subr.bf16.mxu0 %v617
  %866 = vmatpush2.bf16.msra.mxu0 %v616
  %867 = vmatprep.subr.bf16.mxu0 %v613
  %868 = vmatpush2.bf16.msra.mxu0 %v612
  %869 = vmatprep.subr.bf16.mxu0 %v609
  %870 = vmatpush2.bf16.msra.mxu0 %v608
  %871 = vmatprep.subr.bf16.mxu0 %v605
  %872 = vmatpush2.bf16.msra.mxu0 %v604
  %873 = vmatprep.mubr.bf16.mxu0 %v43
  %874 = vmatmul.mubr.bf16.gmra.mxu0 %v42
  %v875 = vpop.f32.mrf.mxu0
  %v876 = vadd.f32 %v177, %v875
  %v877 = vpop.f32.mrf.mxu0
  %v878 = vadd.f32 %v181, %v877
  %v879 = vpop.f32.mrf.mxu0
  %v880 = vpop.f32.mrf.mxu0
  %881 = vdwg.mxu0
  %882 = vmatprep.subr.bf16.mxu0 %v665
  %883 = vmatpush1.bf16.msra.mxu0 %v664
  %884 = vmatprep.subr.bf16.mxu0 %v661
  %885 = vmatpush1.bf16.msra.mxu0 %v660
  %886 = vmatprep.subr.bf16.mxu0 %v657
  %887 = vmatpush1.bf16.msra.mxu0 %v656
  %888 = vmatprep.subr.bf16.mxu0 %v653
  %889 = vmatpush1.bf16.msra.mxu0 %v652
  %890 = vmatprep.subr.bf16.mxu0 %v649
  %891 = vmatpush1.bf16.msra.mxu0 %v648
  %892 = vmatprep.subr.bf16.mxu0 %v645
  %893 = vmatpush1.bf16.msra.mxu0 %v644
  %894 = vmatprep.subr.bf16.mxu0 %v641
  %895 = vmatpush1.bf16.msra.mxu0 %v640
  %896 = vmatprep.subr.bf16.mxu0 %v637
  %897 = vmatpush1.bf16.msra.mxu0 %v636
  %898 = vmatprep.subr.bf16.mxu0 %v833
  %899 = vmatpush2.bf16.msra.mxu0 %v830
  %900 = vmatprep.subr.bf16.mxu0 %v693
  %901 = vmatpush2.bf16.msra.mxu0 %v692
  %902 = vmatprep.subr.bf16.mxu0 %v689
  %903 = vmatpush2.bf16.msra.mxu0 %v688
  %904 = vmatprep.subr.bf16.mxu0 %v685
  %905 = vmatpush2.bf16.msra.mxu0 %v684
  %906 = vmatprep.subr.bf16.mxu0 %v681
  %907 = vmatpush2.bf16.msra.mxu0 %v680
  %908 = vmatprep.subr.bf16.mxu0 %v677
  %909 = vmatpush2.bf16.msra.mxu0 %v676
  %910 = vmatprep.subr.bf16.mxu0 %v673
  %911 = vmatpush2.bf16.msra.mxu0 %v672
  %912 = vmatprep.subr.bf16.mxu0 %v669
  %913 = vmatpush2.bf16.msra.mxu0 %v668
  %914 = vmatprep.mubr.bf16.mxu0 %v826
  %915 = vmatmul.mubr.bf16.gmra.mxu0 %v44
  %v916 = vpop.f32.mrf.mxu0
  %v917 = vadd.f32 %v876, %v916
  %v918 = vpop.f32.mrf.mxu0
  %v919 = vadd.f32 %v878, %v918
  %v920 = vpop.f32.mrf.mxu0
  %v921 = vpop.f32.mrf.mxu0
  %922 = vdwg.mxu0
  %923 = vmatprep.subr.bf16.mxu0 %v603
  %924 = vmatpush1.bf16.msra.mxu0 %v602
  %925 = vmatprep.subr.bf16.mxu0 %v599
  %926 = vmatpush1.bf16.msra.mxu0 %v598
  %927 = vmatprep.subr.bf16.mxu0 %v595
  %928 = vmatpush1.bf16.msra.mxu0 %v594
  %929 = vmatprep.subr.bf16.mxu0 %v591
  %930 = vmatpush1.bf16.msra.mxu0 %v590
  %931 = vmatprep.subr.bf16.mxu0 %v587
  %932 = vmatpush1.bf16.msra.mxu0 %v586
  %933 = vmatprep.subr.bf16.mxu0 %v583
  %934 = vmatpush1.bf16.msra.mxu0 %v582
  %935 = vmatprep.subr.bf16.mxu0 %v579
  %936 = vmatpush1.bf16.msra.mxu0 %v578
  %937 = vmatprep.subr.bf16.mxu0 %v575
  %938 = vmatpush1.bf16.msra.mxu0 %v574
  %939 = vmatprep.subr.bf16.mxu0 %v635
  %940 = vmatpush2.bf16.msra.mxu0 %v634
  %941 = vmatprep.subr.bf16.mxu0 %v631
  %942 = vmatpush2.bf16.msra.mxu0 %v630
  %943 = vmatprep.subr.bf16.mxu0 %v627
  %944 = vmatpush2.bf16.msra.mxu0 %v626
  %945 = vmatprep.subr.bf16.mxu0 %v623
  %946 = vmatpush2.bf16.msra.mxu0 %v622
  %947 = vmatprep.subr.bf16.mxu0 %v619
  %948 = vmatpush2.bf16.msra.mxu0 %v618
  %949 = vmatprep.subr.bf16.mxu0 %v615
  %950 = vmatpush2.bf16.msra.mxu0 %v614
  %951 = vmatprep.subr.bf16.mxu0 %v611
  %952 = vmatpush2.bf16.msra.mxu0 %v610
  %953 = vmatprep.subr.bf16.mxu0 %v607
  %954 = vmatpush2.bf16.msra.mxu0 %v606
  %955 = vmatprep.mubr.bf16.mxu0 %v43
  %956 = vmatmul.mubr.bf16.gmra.mxu0 %v42
  %v957 = vpop.f32.mrf.mxu0
  %v958 = vadd.f32 %v185, %v957
  %v959 = vpop.f32.mrf.mxu0
  %v960 = vadd.f32 %v189, %v959
  %v961 = vpop.f32.mrf.mxu0
  %v962 = vpop.f32.mrf.mxu0
  %963 = vdwg.mxu0
  %964 = vmatprep.subr.bf16.mxu0 %v667
  %965 = vmatpush1.bf16.msra.mxu0 %v666
  %966 = vmatprep.subr.bf16.mxu0 %v663
  %967 = vmatpush1.bf16.msra.mxu0 %v662
  %968 = vmatprep.subr.bf16.mxu0 %v659
  %969 = vmatpush1.bf16.msra.mxu0 %v658
  %970 = vmatprep.subr.bf16.mxu0 %v655
  %971 = vmatpush1.bf16.msra.mxu0 %v654
  %972 = vmatprep.subr.bf16.mxu0 %v651
  %973 = vmatpush1.bf16.msra.mxu0 %v650
  %974 = vmatprep.subr.bf16.mxu0 %v647
  %975 = vmatpush1.bf16.msra.mxu0 %v646
  %976 = vmatprep.subr.bf16.mxu0 %v643
  %977 = vmatpush1.bf16.msra.mxu0 %v642
  %978 = vmatprep.subr.bf16.mxu0 %v639
  %979 = vmatpush1.bf16.msra.mxu0 %v638
  %980 = vmatprep.subr.bf16.mxu0 %v839
  %981 = vmatpush2.bf16.msra.mxu0 %v836
  %982 = vmatprep.subr.bf16.mxu0 %v695
  %983 = vmatpush2.bf16.msra.mxu0 %v694
  %984 = vmatprep.subr.bf16.mxu0 %v691
  %985 = vmatpush2.bf16.msra.mxu0 %v690
  %986 = vmatprep.subr.bf16.mxu0 %v687
  %987 = vmatpush2.bf16.msra.mxu0 %v686
  %988 = vmatprep.subr.bf16.mxu0 %v683
  %989 = vmatpush2.bf16.msra.mxu0 %v682
  %990 = vmatprep.subr.bf16.mxu0 %v679
  %991 = vmatpush2.bf16.msra.mxu0 %v678
  %992 = vmatprep.subr.bf16.mxu0 %v675
  %993 = vmatpush2.bf16.msra.mxu0 %v674
  %994 = vmatprep.subr.bf16.mxu0 %v671
  %995 = vmatpush2.bf16.msra.mxu0 %v670
  %996 = vmatprep.mubr.bf16.mxu0 %v826
  %997 = vmatmul.mubr.bf16.gmra.mxu0 %v44
  %v998 = vpop.f32.mrf.mxu0
  %v999 = vadd.f32 %v958, %v998
  %v1000 = vpop.f32.mrf.mxu0
  %v1001 = vadd.f32 %v960, %v1000
  %v1002 = vpop.f32.mrf.mxu0
  %v1003 = vpop.f32.mrf.mxu0
  %1004 = vdwg.mxu0
  %v1005 = vmax.f32 %v917, 0.0
  %v1006 = vmax.f32 %v919, 0.0
  %v1007 = vmax.f32 %v999, 0.0
  %v1008 = vmax.f32 %v1001, 0.0
  %v1009 = vpack.c.bf16 %v1005, %v1005
  %v1010 = vpack.c.bf16 %v1006, %v1006
  %v1011 = vpack.c.bf16 %v1007, %v1007
  %v1012 = vpack.c.bf16 %v1008, %v1008
  %v1013 = vld [vmem:[%s4] sm:$0xf]
  %v1014 = vld [vmem:[%s4 + $0x4] sm:$0xf]
  %v1015 = vld [vmem:[%s4 + $0x8] sm:$0xf]
  %v1016 = vld [vmem:[%s4 + $0xc] sm:$0xf]
  %v1017 = vld [vmem:[%s4 + $0x10] sm:$0xf]
  %v1018 = vld [vmem:[%s4 + $0x14] sm:$0xf]
  %v1019 = vld [vmem:[%s4 + $0x18] sm:$0xf]
  %v1020 = vld [vmem:[%s4 + $0x1c] sm:$0xf]
  %v1021 = vld [vmem:[%s4 + $0x20] sm:$0xf]
  %v1022 = vld [vmem:[%s4 + $0x24] sm:$0xf]
  %v1023 = vld [vmem:[%s4 + $0x28] sm:$0xf]
  %v1024 = vld [vmem:[%s4 + $0x2c] sm:$0xf]
  %v1025 = vld [vmem:[%s4 + $0x30] sm:$0xf]
  %v1026 = vld [vmem:[%s4 + $0x34] sm:$0xf]
  %v1027 = vld [vmem:[%s4 + $0x38] sm:$0xf]
  %v1028 = vld [vmem:[%s4 + $0x3c] sm:$0xf]
  %v1029 = vld [vmem:[%s4 + $0x40] sm:$0xf]
  %v1030 = vld [vmem:[%s4 + $0x44] sm:$0xf]
  %v1031 = vld [vmem:[%s4 + $0x48] sm:$0xf]
  %v1032 = vld [vmem:[%s4 + $0x4c] sm:$0xf]
  %v1033 = vld [vmem:[%s4 + $0x50] sm:$0xf]
  %v1034 = vld [vmem:[%s4 + $0x54] sm:$0xf]
  %v1035 = vld [vmem:[%s4 + $0x58] sm:$0xf]
  %v1036 = vld [vmem:[%s4 + $0x5c] sm:$0xf]
  %v1037 = vld [vmem:[%s4 + $0x60] sm:$0xf]
  %v1038 = vld [vmem:[%s4 + $0x64] sm:$0xf]
  %v1039 = vld [vmem:[%s4 + $0x68] sm:$0xf]
  %v1040 = vld [vmem:[%s4 + $0x6c] sm:$0xf]
  %v1041 = vld [vmem:[%s4 + $0x70] sm:$0xf]
  %v1042 = vld [vmem:[%s4 + $0x74] sm:$0xf]
  %v1043 = vld [vmem:[%s4 + $0x78] sm:$0xf]
  %v1044 = vld [vmem:[%s4 + $0x7c] sm:$0xf]
  %v1045 = vld [vmem:[%s4 + $0x80] sm:$0xf]
  %v1046 = vld [vmem:[%s4 + $0x84] sm:$0xf]
  %v1047 = vld [vmem:[%s4 + $0x88] sm:$0xf]
  %v1048 = vld [vmem:[%s4 + $0x8c] sm:$0xf]
  %v1049 = vld [vmem:[%s4 + $0x90] sm:$0xf]
  %v1050 = vld [vmem:[%s4 + $0x94] sm:$0xf]
  %v1051 = vld [vmem:[%s4 + $0x98] sm:$0xf]
  %v1052 = vld [vmem:[%s4 + $0x9c] sm:$0xf]
  %v1053 = vld [vmem:[%s4 + $0xa0] sm:$0xf]
  %v1054 = vld [vmem:[%s4 + $0xa4] sm:$0xf]
  %v1055 = vld [vmem:[%s4 + $0xa8] sm:$0xf]
  %v1056 = vld [vmem:[%s4 + $0xac] sm:$0xf]
  %v1057 = vld [vmem:[%s4 + $0xb0] sm:$0xf]
  %v1058 = vld [vmem:[%s4 + $0xb4] sm:$0xf]
  %v1059 = vld [vmem:[%s4 + $0xb8] sm:$0xf]
  %v1060 = vld [vmem:[%s4 + $0xbc] sm:$0xf]
  %v1061 = vld [vmem:[%s4 + $0xc0] sm:$0xf]
  %v1062 = vld [vmem:[%s4 + $0xc4] sm:$0xf]
  %v1063 = vld [vmem:[%s5] sm:$0x1]
  %v1065 = vlaneseq
  %v1066 = vshrl.u32 %v1065, 7
  %v1067 = vsub.s32 0, %v1066
  %v1068 = vrot.slane %v1063, %v1067
  %v1120 = vunpack.c.l.b16 %v1013
  %v1121 = vunpack.c.l.b16 %v1014
  %v1122 = vunpack.c.l.b16 %v1015
  %v1123 = vunpack.c.l.b16 %v1016
  %v1124 = vunpack.c.l.b16 %v1017
  %v1125 = vunpack.c.l.b16 %v1018
  %v1126 = vunpack.c.l.b16 %v1019
  %v1127 = vunpack.c.l.b16 %v1020
  %v1128 = vunpack.c.l.b16 %v1021
  %v1129 = vunpack.c.l.b16 %v1022
  %v1130 = vunpack.c.l.b16 %v1023
  %v1131 = vunpack.c.l.b16 %v1024
  %v1132 = vunpack.c.l.b16 %v1025
  %v1133 = vunpack.c.l.b16 %v1026
  %v1134 = vunpack.c.l.b16 %v1027
  %v1135 = vunpack.c.l.b16 %v1028
  %v1136 = vunpack.c.l.b16 %v1029
  %v1137 = vunpack.c.l.b16 %v1030
  %v1138 = vunpack.c.l.b16 %v1031
  %v1139 = vunpack.c.l.b16 %v1032
  %v1140 = vunpack.c.l.b16 %v1033
  %v1141 = vunpack.c.l.b16 %v1034
  %v1142 = vunpack.c.l.b16 %v1035
  %v1143 = vunpack.c.l.b16 %v1036
  %v1144 = vunpack.c.l.b16 %v1037
  %v1145 = vunpack.c.l.b16 %v1038
  %v1146 = vunpack.c.l.b16 %v1039
  %v1147 = vunpack.c.l.b16 %v1040
  %v1148 = vunpack.c.l.b16 %v1041
  %v1149 = vunpack.c.l.b16 %v1042
  %v1150 = vunpack.c.l.b16 %v1043
  %v1151 = vunpack.c.l.b16 %v1044
  %v1152 = vunpack.c.l.b16 %v1045
  %v1153 = vunpack.c.l.b16 %v1046
  %v1154 = vunpack.c.l.b16 %v1047
  %v1155 = vunpack.c.l.b16 %v1048
  %v1156 = vunpack.c.l.b16 %v1049
  %v1157 = vunpack.c.l.b16 %v1050
  %v1158 = vunpack.c.l.b16 %v1051
  %v1159 = vunpack.c.l.b16 %v1052
  %v1160 = vunpack.c.l.b16 %v1053
  %v1161 = vunpack.c.l.b16 %v1054
  %v1162 = vunpack.c.l.b16 %v1055
  %v1163 = vunpack.c.l.b16 %v1056
  %v1164 = vunpack.c.l.b16 %v1057
  %v1165 = vunpack.c.l.b16 %v1058
  %v1166 = vunpack.c.l.b16 %v1059
  %v1167 = vunpack.c.l.b16 %v1060
  %v1168 = vunpack.c.l.b16 %v1061
  %v1169 = vunpack.c.l.b16 %v1062
  %v1170 = vpack.c.b16 %v1121, %v1120
  %v1171 = vpack.c.b16 %v1123, %v1122
  %v1172 = vpack.c.b16 %v1125, %v1124
  %v1173 = vpack.c.b16 %v1127, %v1126
  %v1174 = vpack.c.b16 %v1129, %v1128
  %v1175 = vpack.c.b16 %v1131, %v1130
  %v1176 = vpack.c.b16 %v1133, %v1132
  %v1177 = vpack.c.b16 %v1135, %v1134
  %v1178 = vpack.c.b16 %v1137, %v1136
  %v1179 = vpack.c.b16 %v1139, %v1138
  %v1180 = vpack.c.b16 %v1141, %v1140
  %v1181 = vpack.c.b16 %v1143, %v1142
  %v1182 = vpack.c.b16 %v1145, %v1144
  %v1183 = vpack.c.b16 %v1147, %v1146
  %v1184 = vpack.c.b16 %v1149, %v1148
  %v1185 = vpack.c.b16 %v1151, %v1150
  %v1186 = vpack.c.b16 %v1153, %v1152
  %v1187 = vpack.c.b16 %v1155, %v1154
  %v1188 = vpack.c.b16 %v1157, %v1156
  %v1189 = vpack.c.b16 %v1159, %v1158
  %v1190 = vpack.c.b16 %v1161, %v1160
  %v1191 = vpack.c.b16 %v1163, %v1162
  %v1192 = vpack.c.b16 %v1165, %v1164
  %v1193 = vpack.c.b16 %v1167, %v1166
  %v1194 = vpack.c.b16 %v1169, %v1168
  %vm1220 = vcmask 130048
  %v1222 = vsel %vm1220, %v1012, 0
  %1224 = vmatprep.subr.bf16.mxu0 0
  %1225 = vmatpush1.bf16.msra.mxu0 %v1177
  %1226 = vmatprep.subr.bf16.mxu0 0
  %1227 = vmatpush1.bf16.msra.mxu0 %v1176
  %1228 = vmatprep.subr.bf16.mxu0 0
  %1229 = vmatpush1.bf16.msra.mxu0 %v1175
  %1230 = vmatprep.subr.bf16.mxu0 0
  %1231 = vmatpush1.bf16.msra.mxu0 %v1174
  %1232 = vmatprep.subr.bf16.mxu0 0
  %1233 = vmatpush1.bf16.msra.mxu0 %v1173
  %1234 = vmatprep.subr.bf16.mxu0 0
  %1235 = vmatpush1.bf16.msra.mxu0 %v1172
  %1236 = vmatprep.subr.bf16.mxu0 0
  %1237 = vmatpush1.bf16.msra.mxu0 %v1171
  %1238 = vmatprep.subr.bf16.mxu0 0
  %1239 = vmatpush1.bf16.msra.mxu0 %v1170
  %1240 = vmatprep.subr.bf16.mxu0 0
  %1241 = vmatpush2.bf16.msra.mxu0 %v1185
  %1242 = vmatprep.subr.bf16.mxu0 0
  %1243 = vmatpush2.bf16.msra.mxu0 %v1184
  %1244 = vmatprep.subr.bf16.mxu0 0
  %1245 = vmatpush2.bf16.msra.mxu0 %v1183
  %1246 = vmatprep.subr.bf16.mxu0 0
  %1247 = vmatpush2.bf16.msra.mxu0 %v1182
  %1248 = vmatprep.subr.bf16.mxu0 0
  %1249 = vmatpush2.bf16.msra.mxu0 %v1181
  %1250 = vmatprep.subr.bf16.mxu0 0
  %1251 = vmatpush2.bf16.msra.mxu0 %v1180
  %1252 = vmatprep.subr.bf16.mxu0 0
  %1253 = vmatpush2.bf16.msra.mxu0 %v1179
  %1254 = vmatprep.subr.bf16.mxu0 0
  %1255 = vmatpush2.bf16.msra.mxu0 %v1178
  %1256 = vmatprep.mubr.bf16.mxu0 %v1010
  %1257 = vmatmul.mubr.bf16.gmra.mxu0 %v1009
  %v1258 = vpop.f32.mrf.mxu0
  %v1259 = vadd.f32 %v1068, %v1258
  %v1260 = vpop.f32.mrf.mxu0
  %v1261 = vpop.f32.mrf.mxu0
  %v1262 = vpop.f32.mrf.mxu0
  %1263 = vdwg.mxu0
  %1264 = vmatprep.subr.bf16.mxu0 0
  %1265 = vmatpush1.bf16.msra.mxu0 %v1193
  %1266 = vmatprep.subr.bf16.mxu0 0
  %1267 = vmatpush1.bf16.msra.mxu0 %v1192
  %1268 = vmatprep.subr.bf16.mxu0 0
  %1269 = vmatpush1.bf16.msra.mxu0 %v1191
  %1270 = vmatprep.subr.bf16.mxu0 0
  %1271 = vmatpush1.bf16.msra.mxu0 %v1190
  %1272 = vmatprep.subr.bf16.mxu0 0
  %1273 = vmatpush1.bf16.msra.mxu0 %v1189
  %1274 = vmatprep.subr.bf16.mxu0 0
  %1275 = vmatpush1.bf16.msra.mxu0 %v1188
  %1276 = vmatprep.subr.bf16.mxu0 0
  %1277 = vmatpush1.bf16.msra.mxu0 %v1187
  %1278 = vmatprep.subr.bf16.mxu0 0
  %1279 = vmatpush1.bf16.msra.mxu0 %v1186
  %1280 = vmatprep.subr.bf16.mxu0 0
  %1281 = vmatpush2.bf16.msra.mxu0 0
  %1282 = vmatprep.subr.bf16.mxu0 0
  %1283 = vmatpush2.bf16.msra.mxu0 0
  %1284 = vmatprep.subr.bf16.mxu0 0
  %1285 = vmatpush2.bf16.msra.mxu0 0
  %1286 = vmatprep.subr.bf16.mxu0 0
  %1287 = vmatpush2.bf16.msra.mxu0 0
  %1288 = vmatprep.subr.bf16.mxu0 0
  %1289 = vmatpush2.bf16.msra.mxu0 0
  %1290 = vmatprep.subr.bf16.mxu0 0
  %1291 = vmatpush2.bf16.msra.mxu0 0
  %1292 = vmatprep.subr.bf16.mxu0 0
  %1293 = vmatpush2.bf16.msra.mxu0 0
  %1294 = vmatprep.subr.bf16.mxu0 0
  %1295 = vmatpush2.bf16.msra.mxu0 %v1194
  %1296 = vmatprep.mubr.bf16.mxu0 %v1222
  %1297 = vmatmul.mubr.bf16.gmra.mxu0 %v1011
  %v1298 = vpop.f32.mrf.mxu0
  %v1299 = vadd.f32 %v1259, %v1298
  %v1300 = vpop.f32.mrf.mxu0
  %v1301 = vpop.f32.mrf.mxu0
  %v1302 = vpop.f32.mrf.mxu0
  %1303 = vdwg.mxu0
  %v1304 = vld [vmem:[%s1] sm:$0xff]
  %v1305 = vmul.f32 %v1299, 0.5
  %v1306 = vmul.f32 %v1305, 1.442695
  %v1307 = vpow.pop %v1306
  %1309 = vrot.lane.b32.xlu0 %v1307, 108
  %v1310 = vpop.permute.xlu0 %1309
  %v1312 = vmul.f32 %v1304, %v1310
  %v1313 = vadd.f32 %v1299, %v1312
  %v1314 = vpack.c.bf16 %v1313, %v1313
  %v1315 = vld [vmem:[%s6] sm:$0xff]
  %v1316 = vld [vmem:[%s6 + $0x8] sm:$0xff]
  %v1317 = vld [vmem:[%s6 + $0x10] sm:$0xff]
  %v1318 = vld [vmem:[%s6 + $0x18] sm:$0xff]
  %v1319 = vld [vmem:[%s6 + $0x20] sm:$0x33]
  %v1320 = vld [vmem:[%s6 + $0x28] sm:$0x33]
  %v1321 = vld [vmem:[%s7] sm:$0xf]
  %v1323 = vlaneseq
  %v1324 = vshrl.u32 %v1323, 7
  %v1325 = vsub.s32 0, %v1324
  %v1326 = vrot.slane %v1321, %v1325
  %v1327 = vlaneseq
  %v1328 = vshrl.u32 %v1327, 7
  %v1329 = vsub.s32 1, %v1328
  %v1330 = vrot.slane %v1321, %v1329
  %v1331 = vlaneseq
  %v1332 = vshrl.u32 %v1331, 7
  %v1333 = vsub.s32 2, %v1332
  %v1334 = vrot.slane %v1321, %v1333
  %v1335 = vlaneseq
  %v1336 = vshrl.u32 %v1335, 7
  %v1337 = vsub.s32 3, %v1336
  %v1338 = vrot.slane %v1321, %v1337
  %v1349 = vunpack.c.l.b16 %v1315
  %v1350 = vunpack.c.h.b16 %v1315
  %v1351 = vunpack.c.l.b16 %v1316
  %v1352 = vunpack.c.h.b16 %v1316
  %v1353 = vunpack.c.l.b16 %v1317
  %v1354 = vunpack.c.h.b16 %v1317
  %v1355 = vunpack.c.l.b16 %v1318
  %v1356 = vunpack.c.h.b16 %v1318
  %v1357 = vunpack.c.l.b16 %v1319
  %v1358 = vunpack.c.h.b16 %v1319
  %v1359 = vunpack.c.l.b16 %v1320
  %v1360 = vunpack.c.h.b16 %v1320
  %v1361 = vpack.c.b16 %v1353, %v1349
  %v1362 = vpack.c.b16 %v1354, %v1350
  %v1363 = vpack.c.b16 %v1355, %v1351
  %v1364 = vpack.c.b16 %v1356, %v1352
  %v1365 = vpack.c.b16 %v1357, %v1357
  %v1366 = vpack.c.b16 %v1358, %v1358
  %v1367 = vpack.c.b16 %v1359, %v1359
  %v1368 = vpack.c.b16 %v1360, %v1360
  %vm1373 = vcmask 162816
  %v1375 = vsel %vm1373, %v1314, 0
  %v1378 = vsel %vm828, %v1365, 0
  %v1381 = vsel %vm828, %v1366, 0
  %v1384 = vsel %vm828, %v1367, 0
  %v1387 = vsel %vm828, %v1368, 0
  %1389 = vmatprep.subr.bf16.mxu0 0
  %1390 = vmatpush1.bf16.msra.mxu0 0
  %1391 = vmatprep.subr.bf16.mxu0 0
  %1392 = vmatpush1.bf16.msra.mxu0 0
  %1393 = vmatprep.subr.bf16.mxu0 0
  %1394 = vmatpush1.bf16.msra.mxu0 0
  %1395 = vmatprep.subr.bf16.mxu0 0
  %1396 = vmatpush1.bf16.msra.mxu0 0
  %1397 = vmatprep.subr.bf16.mxu0 0
  %1398 = vmatpush1.bf16.msra.mxu0 0
  %1399 = vmatprep.subr.bf16.mxu0 0
  %1400 = vmatpush1.bf16.msra.mxu0 0
  %1401 = vmatprep.subr.bf16.mxu0 %v1381
  %1402 = vmatpush1.bf16.msra.mxu0 %v1378
  %1403 = vmatprep.subr.bf16.mxu0 %v1362
  %1404 = vmatpush1.bf16.msra.mxu0 %v1361
  %1405 = vmatprep.subr.bf16.mxu0 0
  %1406 = vmatpush2.bf16.msra.mxu0 0
  %1407 = vmatprep.subr.bf16.mxu0 0
  %1408 = vmatpush2.bf16.msra.mxu0 0
  %1409 = vmatprep.subr.bf16.mxu0 0
  %1410 = vmatpush2.bf16.msra.mxu0 0
  %1411 = vmatprep.subr.bf16.mxu0 0
  %1412 = vmatpush2.bf16.msra.mxu0 0
  %1413 = vmatprep.subr.bf16.mxu0 0
  %1414 = vmatpush2.bf16.msra.mxu0 0
  %1415 = vmatprep.subr.bf16.mxu0 0
  %1416 = vmatpush2.bf16.msra.mxu0 0
  %1417 = vmatprep.subr.bf16.mxu0 0
  %1418 = vmatpush2.bf16.msra.mxu0 0
  %1419 = vmatprep.subr.bf16.mxu0 0
  %1420 = vmatpush2.bf16.msra.mxu0 0
  %1421 = vmatprep.mubr.bf16.mxu0 0
  %1422 = vmatmul.mubr.bf16.gmra.mxu0 %v1375
  %v1423 = vpop.f32.mrf.mxu0
  %v1424 = vadd.f32 %v1326, %v1423
  %v1425 = vpop.f32.mrf.mxu0
  %v1426 = vadd.f32 %v1330, %v1425
  %v1427 = vpop.f32.mrf.mxu0
  %v1428 = vpop.f32.mrf.mxu0
  %1429 = vdwg.mxu0
  %1430 = vmatprep.subr.bf16.mxu0 0
  %1431 = vmatpush1.bf16.msra.mxu0 0
  %1432 = vmatprep.subr.bf16.mxu0 0
  %1433 = vmatpush1.bf16.msra.mxu0 0
  %1434 = vmatprep.subr.bf16.mxu0 0
  %1435 = vmatpush1.bf16.msra.mxu0 0
  %1436 = vmatprep.subr.bf16.mxu0 0
  %1437 = vmatpush1.bf16.msra.mxu0 0
  %1438 = vmatprep.subr.bf16.mxu0 0
  %1439 = vmatpush1.bf16.msra.mxu0 0
  %1440 = vmatprep.subr.bf16.mxu0 0
  %1441 = vmatpush1.bf16.msra.mxu0 0
  %1442 = vmatprep.subr.bf16.mxu0 %v1387
  %1443 = vmatpush1.bf16.msra.mxu0 %v1384
  %1444 = vmatprep.subr.bf16.mxu0 %v1364
  %1445 = vmatpush1.bf16.msra.mxu0 %v1363
  %1446 = vmatprep.subr.bf16.mxu0 0
  %1447 = vmatpush2.bf16.msra.mxu0 0
  %1448 = vmatprep.subr.bf16.mxu0 0
  %1449 = vmatpush2.bf16.msra.mxu0 0
  %1450 = vmatprep.subr.bf16.mxu0 0
  %1451 = vmatpush2.bf16.msra.mxu0 0
  %1452 = vmatprep.subr.bf16.mxu0 0
  %1453 = vmatpush2.bf16.msra.mxu0 0
  %1454 = vmatprep.subr.bf16.mxu0 0
  %1455 = vmatpush2.bf16.msra.mxu0 0
  %1456 = vmatprep.subr.bf16.mxu0 0
  %1457 = vmatpush2.bf16.msra.mxu0 0
  %1458 = vmatprep.subr.bf16.mxu0 0
  %1459 = vmatpush2.bf16.msra.mxu0 0
  %1460 = vmatprep.subr.bf16.mxu0 0
  %1461 = vmatpush2.bf16.msra.mxu0 0
  %1462 = vmatprep.mubr.bf16.mxu0 0
  %1463 = vmatmul.mubr.bf16.gmra.mxu0 %v1375
  %v1464 = vpop.f32.mrf.mxu0
  %v1465 = vadd.f32 %v1334, %v1464
  %v1466 = vpop.f32.mrf.mxu0
  %v1467 = vadd.f32 %v1338, %v1466
  %v1468 = vpop.f32.mrf.mxu0
  %v1469 = vpop.f32.mrf.mxu0
  %1470 = vdwg.mxu0
  %v1471 = vmax.f32 %v1424, 0.0
  %v1472 = vmax.f32 %v1426, 0.0
  %v1473 = vmax.f32 %v1465, 0.0
  %v1474 = vmax.f32 %v1467, 0.0
  %v1475 = vpack.c.bf16 %v1471, %v1471
  %v1476 = vpack.c.bf16 %v1472, %v1472
  %v1477 = vpack.c.bf16 %v1473, %v1473
  %v1478 = vpack.c.bf16 %v1474, %v1474
  %v1479 = vld [vmem:[%s8] sm:$0xff]
  %v1480 = vld [vmem:[%s8 + $0x8] sm:$0xff]
  %v1481 = vld [vmem:[%s8 + $0x10] sm:$0xff]
  %v1482 = vld [vmem:[%s8 + $0x18] sm:$0xf]
  %v1483 = vld [vmem:[%s8 + $0x1c] sm:$0xff]
  %v1484 = vld [vmem:[%s8 + $0x24] sm:$0xff]
  %v1485 = vld [vmem:[%s8 + $0x2c] sm:$0xff]
  %v1486 = vld [vmem:[%s8 + $0x34] sm:$0xf]
  %v1487 = vld [vmem:[%s8 + $0x38] sm:$0xff]
  %v1488 = vld [vmem:[%s8 + $0x40] sm:$0xff]
  %v1489 = vld [vmem:[%s8 + $0x48] sm:$0xff]
  %v1490 = vld [vmem:[%s8 + $0x50] sm:$0xf]
  %v1491 = vld [vmem:[%s8 + $0x54] sm:$0xff]
  %v1492 = vld [vmem:[%s8 + $0x5c] sm:$0xff]
  %v1493 = vld [vmem:[%s8 + $0x64] sm:$0xff]
  %v1494 = vld [vmem:[%s8 + $0x6c] sm:$0xf]
  %v1495 = vld [vmem:[%s8 + $0x70] sm:$0xff]
  %v1496 = vld [vmem:[%s8 + $0x78] sm:$0xff]
  %v1497 = vld [vmem:[%s8 + $0x80] sm:$0xff]
  %v1498 = vld [vmem:[%s8 + $0x88] sm:$0xf]
  %v1499 = vld [vmem:[%s8 + $0x8c] sm:$0xff]
  %v1500 = vld [vmem:[%s8 + $0x94] sm:$0xff]
  %v1501 = vld [vmem:[%s8 + $0x9c] sm:$0xff]
  %v1502 = vld [vmem:[%s8 + $0xa4] sm:$0xf]
  %v1503 = vld [vmem:[%s8 + $0xa8] sm:$0xff]
  %v1504 = vld [vmem:[%s8 + $0xb0] sm:$0xff]
  %v1505 = vld [vmem:[%s8 + $0xb8] sm:$0xff]
  %v1506 = vld [vmem:[%s8 + $0xc0] sm:$0xf]
  %v1507 = vld [vmem:[%s8 + $0xc4] sm:$0xff]
  %v1508 = vld [vmem:[%s8 + $0xcc] sm:$0xff]
  %v1509 = vld [vmem:[%s8 + $0xd4] sm:$0xff]
  %v1510 = vld [vmem:[%s8 + $0xdc] sm:$0xf]
  %v1511 = vld [vmem:[%s8 + $0xe0] sm:$0xff]
  %v1512 = vld [vmem:[%s8 + $0xe8] sm:$0xff]
  %v1513 = vld [vmem:[%s8 + $0xf0] sm:$0xff]
  %v1514 = vld [vmem:[%s8 + $0xf8] sm:$0xf]
  %v1515 = vld [vmem:[%s8 + $0xfc] sm:$0xff]
  %v1516 = vld [vmem:[%s8 + $0x104] sm:$0xff]
  %v1517 = vld [vmem:[%s8 + $0x10c] sm:$0xff]
  %v1518 = vld [vmem:[%s8 + $0x114] sm:$0xf]
  %v1519 = vld [vmem:[%s8 + $0x118] sm:$0xff]
  %v1520 = vld [vmem:[%s8 + $0x120] sm:$0xff]
  %v1521 = vld [vmem:[%s8 + $0x128] sm:$0xff]
  %v1522 = vld [vmem:[%s8 + $0x130] sm:$0xf]
  %v1523 = vld [vmem:[%s8 + $0x134] sm:$0xff]
  %v1524 = vld [vmem:[%s8 + $0x13c] sm:$0xff]
  %v1525 = vld [vmem:[%s8 + $0x144] sm:$0xff]
  %v1526 = vld [vmem:[%s8 + $0x14c] sm:$0xf]
  %v1527 = vld [vmem:[%s8 + $0x150] sm:$0xff]
  %v1528 = vld [vmem:[%s8 + $0x158] sm:$0xff]
  %v1529 = vld [vmem:[%s8 + $0x160] sm:$0xff]
  %v1530 = vld [vmem:[%s8 + $0x168] sm:$0xf]
  %v1531 = vld [vmem:[%s8 + $0x16c] sm:$0xff]
  %v1532 = vld [vmem:[%s8 + $0x174] sm:$0xff]
  %v1533 = vld [vmem:[%s8 + $0x17c] sm:$0xff]
  %v1534 = vld [vmem:[%s8 + $0x184] sm:$0xf]
  %v1535 = vld [vmem:[%s8 + $0x188] sm:$0xff]
  %v1536 = vld [vmem:[%s8 + $0x190] sm:$0xff]
  %v1537 = vld [vmem:[%s8 + $0x198] sm:$0xff]
  %v1538 = vld [vmem:[%s8 + $0x1a0] sm:$0xf]
  %v1539 = vld [vmem:[%s8 + $0x1a4] sm:$0xff]
  %v1540 = vld [vmem:[%s8 + $0x1ac] sm:$0xff]
  %v1541 = vld [vmem:[%s8 + $0x1b4] sm:$0xff]
  %v1542 = vld [vmem:[%s8 + $0x1bc] sm:$0xf]
  %v1543 = vld [vmem:[%s8 + $0x1c0] sm:$0xff]
  %v1544 = vld [vmem:[%s8 + $0x1c8] sm:$0xff]
  %v1545 = vld [vmem:[%s8 + $0x1d0] sm:$0xff]
  %v1546 = vld [vmem:[%s8 + $0x1d8] sm:$0xf]
  %v1547 = vld [vmem:[%s8 + $0x1dc] sm:$0xff]
  %v1548 = vld [vmem:[%s8 + $0x1e4] sm:$0xff]
  %v1549 = vld [vmem:[%s8 + $0x1ec] sm:$0xff]
  %v1550 = vld [vmem:[%s8 + $0x1f4] sm:$0xf]
  %v1551 = vld [vmem:[%s8 + $0x1f8] sm:$0xff]
  %v1552 = vld [vmem:[%s8 + $0x200] sm:$0xff]
  %v1553 = vld [vmem:[%s8 + $0x208] sm:$0xff]
  %v1554 = vld [vmem:[%s8 + $0x210] sm:$0xf]
  %v1555 = vld [vmem:[%s8 + $0x214] sm:$0xff]
  %v1556 = vld [vmem:[%s8 + $0x21c] sm:$0xff]
  %v1557 = vld [vmem:[%s8 + $0x224] sm:$0xff]
  %v1558 = vld [vmem:[%s8 + $0x22c] sm:$0xf]
  %v1559 = vld [vmem:[%s8 + $0x230] sm:$0xff]
  %v1560 = vld [vmem:[%s8 + $0x238] sm:$0xff]
  %v1561 = vld [vmem:[%s8 + $0x240] sm:$0xff]
  %v1562 = vld [vmem:[%s8 + $0x248] sm:$0xf]
  %v1563 = vld [vmem:[%s8 + $0x24c] sm:$0xff]
  %v1564 = vld [vmem:[%s8 + $0x254] sm:$0xff]
  %v1565 = vld [vmem:[%s8 + $0x25c] sm:$0xff]
  %v1566 = vld [vmem:[%s8 + $0x264] sm:$0xf]
  %v1567 = vld [vmem:[%s8 + $0x268] sm:$0xff]
  %v1568 = vld [vmem:[%s8 + $0x270] sm:$0xff]
  %v1569 = vld [vmem:[%s8 + $0x278] sm:$0xff]
  %v1570 = vld [vmem:[%s8 + $0x280] sm:$0xf]
  %v1571 = vld [vmem:[%s8 + $0x284] sm:$0xff]
  %v1572 = vld [vmem:[%s8 + $0x28c] sm:$0xff]
  %v1573 = vld [vmem:[%s8 + $0x294] sm:$0xff]
  %v1574 = vld [vmem:[%s8 + $0x29c] sm:$0xf]
  %v1575 = vld [vmem:[%s8 + $0x2a0] sm:$0xff]
  %v1576 = vld [vmem:[%s8 + $0x2a8] sm:$0xff]
  %v1577 = vld [vmem:[%s8 + $0x2b0] sm:$0xff]
  %v1578 = vld [vmem:[%s8 + $0x2b8] sm:$0xf]
  %v1579 = vld [vmem:[%s8 + $0x2bc] sm:$0xff]
  %v1580 = vld [vmem:[%s8 + $0x2c4] sm:$0xff]
  %v1581 = vld [vmem:[%s8 + $0x2cc] sm:$0xff]
  %v1582 = vld [vmem:[%s8 + $0x2d4] sm:$0xf]
  %v1583 = vld [vmem:[%s8 + $0x2d8] sm:$0xff]
  %v1584 = vld [vmem:[%s8 + $0x2e0] sm:$0xff]
  %v1585 = vld [vmem:[%s8 + $0x2e8] sm:$0xff]
  %v1586 = vld [vmem:[%s8 + $0x2f0] sm:$0xf]
  %v1587 = vld [vmem:[%s8 + $0x2f4] sm:$0xff]
  %v1588 = vld [vmem:[%s8 + $0x2fc] sm:$0xff]
  %v1589 = vld [vmem:[%s8 + $0x304] sm:$0xff]
  %v1590 = vld [vmem:[%s8 + $0x30c] sm:$0xf]
  %v1591 = vld [vmem:[%s8 + $0x310] sm:$0xff]
  %v1592 = vld [vmem:[%s8 + $0x318] sm:$0xff]
  %v1593 = vld [vmem:[%s8 + $0x320] sm:$0xff]
  %v1594 = vld [vmem:[%s8 + $0x328] sm:$0xf]
  %v1595 = vld [vmem:[%s8 + $0x32c] sm:$0xff]
  %v1596 = vld [vmem:[%s8 + $0x334] sm:$0xff]
  %v1597 = vld [vmem:[%s8 + $0x33c] sm:$0xff]
  %v1598 = vld [vmem:[%s8 + $0x344] sm:$0xf]
  %v1599 = vld [vmem:[%s8 + $0x348] sm:$0xff]
  %v1600 = vld [vmem:[%s8 + $0x350] sm:$0xff]
  %v1601 = vld [vmem:[%s8 + $0x358] sm:$0xff]
  %v1602 = vld [vmem:[%s8 + $0x360] sm:$0xf]
  %v1603 = vld [vmem:[%s8 + $0x364] sm:$0xff]
  %v1604 = vld [vmem:[%s8 + $0x36c] sm:$0xff]
  %v1605 = vld [vmem:[%s8 + $0x374] sm:$0xff]
  %v1606 = vld [vmem:[%s8 + $0x37c] sm:$0xf]
  %v1607 = vld [vmem:[%s8 + $0x380] sm:$0xff]
  %v1608 = vld [vmem:[%s8 + $0x388] sm:$0xff]
  %v1609 = vld [vmem:[%s8 + $0x390] sm:$0xff]
  %v1610 = vld [vmem:[%s8 + $0x398] sm:$0xf]
  %v1611 = vld [vmem:[%s8 + $0x39c] sm:$0xff]
  %v1612 = vld [vmem:[%s8 + $0x3a4] sm:$0xff]
  %v1613 = vld [vmem:[%s8 + $0x3ac] sm:$0xff]
  %v1614 = vld [vmem:[%s8 + $0x3b4] sm:$0xf]
  %v1615 = vld [vmem:[%s8 + $0x3b8] sm:$0xff]
  %v1616 = vld [vmem:[%s8 + $0x3c0] sm:$0xff]
  %v1617 = vld [vmem:[%s8 + $0x3c8] sm:$0xff]
  %v1618 = vld [vmem:[%s8 + $0x3d0] sm:$0xf]
  %v1619 = vld [vmem:[%s8 + $0x3d4] sm:$0xff]
  %v1620 = vld [vmem:[%s8 + $0x3dc] sm:$0xff]
  %v1621 = vld [vmem:[%s8 + $0x3e4] sm:$0xff]
  %v1622 = vld [vmem:[%s8 + $0x3ec] sm:$0xf]
  %v1623 = vld [vmem:[%s8 + $0x3f0] sm:$0xff]
  %v1624 = vld [vmem:[%s8 + $0x3f8] sm:$0xff]
  %v1625 = vld [vmem:[%s8 + $0x400] sm:$0xff]
  %v1626 = vld [vmem:[%s8 + $0x408] sm:$0xf]
  %v1627 = vld [vmem:[%s8 + $0x40c] sm:$0xff]
  %v1628 = vld [vmem:[%s8 + $0x414] sm:$0xff]
  %v1629 = vld [vmem:[%s8 + $0x41c] sm:$0xff]
  %v1630 = vld [vmem:[%s8 + $0x424] sm:$0xf]
  %v1631 = vld [vmem:[%s8 + $0x428] sm:$0xff]
  %v1632 = vld [vmem:[%s8 + $0x430] sm:$0xff]
  %v1633 = vld [vmem:[%s8 + $0x438] sm:$0xff]
  %v1634 = vld [vmem:[%s8 + $0x440] sm:$0xf]
  %v1635 = vld [vmem:[%s8 + $0x444] sm:$0xff]
  %v1636 = vld [vmem:[%s8 + $0x44c] sm:$0xff]
  %v1637 = vld [vmem:[%s8 + $0x454] sm:$0xff]
  %v1638 = vld [vmem:[%s8 + $0x45c] sm:$0xf]
  %v1639 = vld [vmem:[%s8 + $0x460] sm:$0xff]
  %v1640 = vld [vmem:[%s8 + $0x468] sm:$0xff]
  %v1641 = vld [vmem:[%s8 + $0x470] sm:$0xff]
  %v1642 = vld [vmem:[%s8 + $0x478] sm:$0xf]
  %v1643 = vld [vmem:[%s8 + $0x47c] sm:$0xff]
  %v1644 = vld [vmem:[%s8 + $0x484] sm:$0xff]
  %v1645 = vld [vmem:[%s8 + $0x48c] sm:$0xff]
  %v1646 = vld [vmem:[%s8 + $0x494] sm:$0xf]
  %v1647 = vld [vmem:[%s8 + $0x498] sm:$0xff]
  %v1648 = vld [vmem:[%s8 + $0x4a0] sm:$0xff]
  %v1649 = vld [vmem:[%s8 + $0x4a8] sm:$0xff]
  %v1650 = vld [vmem:[%s8 + $0x4b0] sm:$0xf]
  %v1651 = vld [vmem:[%s8 + $0x4b4] sm:$0xff]
  %v1652 = vld [vmem:[%s8 + $0x4bc] sm:$0xff]
  %v1653 = vld [vmem:[%s8 + $0x4c4] sm:$0xff]
  %v1654 = vld [vmem:[%s8 + $0x4cc] sm:$0xf]
  %v1655 = vld [vmem:[%s8 + $0x4d0] sm:$0xff]
  %v1656 = vld [vmem:[%s8 + $0x4d8] sm:$0xff]
  %v1657 = vld [vmem:[%s8 + $0x4e0] sm:$0xff]
  %v1658 = vld [vmem:[%s8 + $0x4e8] sm:$0xf]
  %v1659 = vld [vmem:[%s8 + $0x4ec] sm:$0xff]
  %v1660 = vld [vmem:[%s8 + $0x4f4] sm:$0xff]
  %v1661 = vld [vmem:[%s8 + $0x4fc] sm:$0xff]
  %v1662 = vld [vmem:[%s8 + $0x504] sm:$0xf]
  %v1663 = vld [vmem:[%s8 + $0x508] sm:$0xff]
  %v1664 = vld [vmem:[%s8 + $0x510] sm:$0xff]
  %v1665 = vld [vmem:[%s8 + $0x518] sm:$0xff]
  %v1666 = vld [vmem:[%s8 + $0x520] sm:$0xf]
  %v1667 = vld [vmem:[%s8 + $0x524] sm:$0xff]
  %v1668 = vld [vmem:[%s8 + $0x52c] sm:$0xff]
  %v1669 = vld [vmem:[%s8 + $0x534] sm:$0xff]
  %v1670 = vld [vmem:[%s8 + $0x53c] sm:$0xf]
  %v1671 = vld [vmem:[%s8 + $0x540] sm:$0xff]
  %v1672 = vld [vmem:[%s8 + $0x548] sm:$0xff]
  %v1673 = vld [vmem:[%s8 + $0x550] sm:$0xff]
  %v1674 = vld [vmem:[%s8 + $0x558] sm:$0xf]
  %v1675 = vld [vmem:[%s8 + $0x55c] sm:$0xff]
  %v1676 = vld [vmem:[%s8 + $0x564] sm:$0xff]
  %v1677 = vld [vmem:[%s8 + $0x56c] sm:$0xff]
  %v1678 = vld [vmem:[%s8 + $0x574] sm:$0xf]
  %v1679 = vld [vmem:[%s9] sm:$0x7f]
  %v1681 = vlaneseq
  %v1682 = vshrl.u32 %v1681, 7
  %v1683 = vsub.s32 0, %v1682
  %v1684 = vrot.slane %v1679, %v1683
  %v1685 = vlaneseq
  %v1686 = vshrl.u32 %v1685, 7
  %v1687 = vsub.s32 1, %v1686
  %v1688 = vrot.slane %v1679, %v1687
  %v1689 = vlaneseq
  %v1690 = vshrl.u32 %v1689, 7
  %v1691 = vsub.s32 2, %v1690
  %v1692 = vrot.slane %v1679, %v1691
  %v1693 = vlaneseq
  %v1694 = vshrl.u32 %v1693, 7
  %v1695 = vsub.s32 3, %v1694
  %v1696 = vrot.slane %v1679, %v1695
  %v1697 = vlaneseq
  %v1698 = vshrl.u32 %v1697, 7
  %v1699 = vsub.s32 4, %v1698
  %v1700 = vrot.slane %v1679, %v1699
  %v1701 = vlaneseq
  %v1702 = vshrl.u32 %v1701, 7
  %v1703 = vsub.s32 5, %v1702
  %v1704 = vrot.slane %v1679, %v1703
  %v1705 = vlaneseq
  %v1706 = vshrl.u32 %v1705, 7
  %v1707 = vsub.s32 6, %v1706
  %v1708 = vrot.slane %v1679, %v1707
  %v1916 = vunpack.c.l.b16 %v1479
  %v1917 = vunpack.c.h.b16 %v1479
  %v1918 = vunpack.c.l.b16 %v1480
  %v1919 = vunpack.c.h.b16 %v1480
  %v1920 = vunpack.c.l.b16 %v1481
  %v1921 = vunpack.c.h.b16 %v1481
  %v1922 = vunpack.c.l.b16 %v1482
  %v1923 = vunpack.c.l.b16 %v1483
  %v1924 = vunpack.c.h.b16 %v1483
  %v1925 = vunpack.c.l.b16 %v1484
  %v1926 = vunpack.c.h.b16 %v1484
  %v1927 = vunpack.c.l.b16 %v1485
  %v1928 = vunpack.c.h.b16 %v1485
  %v1929 = vunpack.c.l.b16 %v1486
  %v1930 = vunpack.c.l.b16 %v1487
  %v1931 = vunpack.c.h.b16 %v1487
  %v1932 = vunpack.c.l.b16 %v1488
  %v1933 = vunpack.c.h.b16 %v1488
  %v1934 = vunpack.c.l.b16 %v1489
  %v1935 = vunpack.c.h.b16 %v1489
  %v1936 = vunpack.c.l.b16 %v1490
  %v1937 = vunpack.c.l.b16 %v1491
  %v1938 = vunpack.c.h.b16 %v1491
  %v1939 = vunpack.c.l.b16 %v1492
  %v1940 = vunpack.c.h.b16 %v1492
  %v1941 = vunpack.c.l.b16 %v1493
  %v1942 = vunpack.c.h.b16 %v1493
  %v1943 = vunpack.c.l.b16 %v1494
  %v1944 = vunpack.c.l.b16 %v1495
  %v1945 = vunpack.c.h.b16 %v1495
  %v1946 = vunpack.c.l.b16 %v1496
  %v1947 = vunpack.c.h.b16 %v1496
  %v1948 = vunpack.c.l.b16 %v1497
  %v1949 = vunpack.c.h.b16 %v1497
  %v1950 = vunpack.c.l.b16 %v1498
  %v1951 = vunpack.c.l.b16 %v1499
  %v1952 = vunpack.c.h.b16 %v1499
  %v1953 = vunpack.c.l.b16 %v1500
  %v1954 = vunpack.c.h.b16 %v1500
  %v1955 = vunpack.c.l.b16 %v1501
  %v1956 = vunpack.c.h.b16 %v1501
  %v1957 = vunpack.c.l.b16 %v1502
  %v1958 = vunpack.c.l.b16 %v1503
  %v1959 = vunpack.c.h.b16 %v1503
  %v1960 = vunpack.c.l.b16 %v1504
  %v1961 = vunpack.c.h.b16 %v1504
  %v1962 = vunpack.c.l.b16 %v1505
  %v1963 = vunpack.c.h.b16 %v1505
  %v1964 = vunpack.c.l.b16 %v1506
  %v1965 = vunpack.c.l.b16 %v1507
  %v1966 = vunpack.c.h.b16 %v1507
  %v1967 = vunpack.c.l.b16 %v1508
  %v1968 = vunpack.c.h.b16 %v1508
  %v1969 = vunpack.c.l.b16 %v1509
  %v1970 = vunpack.c.h.b16 %v1509
  %v1971 = vunpack.c.l.b16 %v1510
  %v1972 = vunpack.c.l.b16 %v1511
  %v1973 = vunpack.c.h.b16 %v1511
  %v1974 = vunpack.c.l.b16 %v1512
  %v1975 = vunpack.c.h.b16 %v1512
  %v1976 = vunpack.c.l.b16 %v1513
  %v1977 = vunpack.c.h.b16 %v1513
  %v1978 = vunpack.c.l.b16 %v1514
  %v1979 = vunpack.c.l.b16 %v1515
  %v1980 = vunpack.c.h.b16 %v1515
  %v1981 = vunpack.c.l.b16 %v1516
  %v1982 = vunpack.c.h.b16 %v1516
  %v1983 = vunpack.c.l.b16 %v1517
  %v1984 = vunpack.c.h.b16 %v1517
  %v1985 = vunpack.c.l.b16 %v1518
  %v1986 = vunpack.c.l.b16 %v1519
  %v1987 = vunpack.c.h.b16 %v1519
  %v1988 = vunpack.c.l.b16 %v1520
  %v1989 = vunpack.c.h.b16 %v1520
  %v1990 = vunpack.c.l.b16 %v1521
  %v1991 = vunpack.c.h.b16 %v1521
  %v1992 = vunpack.c.l.b16 %v1522
  %v1993 = vunpack.c.l.b16 %v1523
  %v1994 = vunpack.c.h.b16 %v1523
  %v1995 = vunpack.c.l.b16 %v1524
  %v1996 = vunpack.c.h.b16 %v1524
  %v1997 = vunpack.c.l.b16 %v1525
  %v1998 = vunpack.c.h.b16 %v1525
  %v1999 = vunpack.c.l.b16 %v1526
  %v2000 = vunpack.c.l.b16 %v1527
  %v2001 = vunpack.c.h.b16 %v1527
  %v2002 = vunpack.c.l.b16 %v1528
  %v2003 = vunpack.c.h.b16 %v1528
  %v2004 = vunpack.c.l.b16 %v1529
  %v2005 = vunpack.c.h.b16 %v1529
  %v2006 = vunpack.c.l.b16 %v1530
  %v2007 = vunpack.c.l.b16 %v1531
  %v2008 = vunpack.c.h.b16 %v1531
  %v2009 = vunpack.c.l.b16 %v1532
  %v2010 = vunpack.c.h.b16 %v1532
  %v2011 = vunpack.c.l.b16 %v1533
  %v2012 = vunpack.c.h.b16 %v1533
  %v2013 = vunpack.c.l.b16 %v1534
  %v2014 = vunpack.c.l.b16 %v1535
  %v2015 = vunpack.c.h.b16 %v1535
  %v2016 = vunpack.c.l.b16 %v1536
  %v2017 = vunpack.c.h.b16 %v1536
  %v2018 = vunpack.c.l.b16 %v1537
  %v2019 = vunpack.c.h.b16 %v1537
  %v2020 = vunpack.c.l.b16 %v1538
  %v2021 = vunpack.c.l.b16 %v1539
  %v2022 = vunpack.c.h.b16 %v1539
  %v2023 = vunpack.c.l.b16 %v1540
  %v2024 = vunpack.c.h.b16 %v1540
  %v2025 = vunpack.c.l.b16 %v1541
  %v2026 = vunpack.c.h.b16 %v1541
  %v2027 = vunpack.c.l.b16 %v1542
  %v2028 = vunpack.c.l.b16 %v1543
  %v2029 = vunpack.c.h.b16 %v1543
  %v2030 = vunpack.c.l.b16 %v1544
  %v2031 = vunpack.c.h.b16 %v1544
  %v2032 = vunpack.c.l.b16 %v1545
  %v2033 = vunpack.c.h.b16 %v1545
  %v2034 = vunpack.c.l.b16 %v1546
  %v2035 = vunpack.c.l.b16 %v1547
  %v2036 = vunpack.c.h.b16 %v1547
  %v2037 = vunpack.c.l.b16 %v1548
  %v2038 = vunpack.c.h.b16 %v1548
  %v2039 = vunpack.c.l.b16 %v1549
  %v2040 = vunpack.c.h.b16 %v1549
  %v2041 = vunpack.c.l.b16 %v1550
  %v2042 = vunpack.c.l.b16 %v1551
  %v2043 = vunpack.c.h.b16 %v1551
  %v2044 = vunpack.c.l.b16 %v1552
  %v2045 = vunpack.c.h.b16 %v1552
  %v2046 = vunpack.c.l.b16 %v1553
  %v2047 = vunpack.c.h.b16 %v1553
  %v2048 = vunpack.c.l.b16 %v1554
  %v2049 = vunpack.c.l.b16 %v1555
  %v2050 = vunpack.c.h.b16 %v1555
  %v2051 = vunpack.c.l.b16 %v1556
  %v2052 = vunpack.c.h.b16 %v1556
  %v2053 = vunpack.c.l.b16 %v1557
  %v2054 = vunpack.c.h.b16 %v1557
  %v2055 = vunpack.c.l.b16 %v1558
  %v2056 = vunpack.c.l.b16 %v1559
  %v2057 = vunpack.c.h.b16 %v1559
  %v2058 = vunpack.c.l.b16 %v1560
  %v2059 = vunpack.c.h.b16 %v1560
  %v2060 = vunpack.c.l.b16 %v1561
  %v2061 = vunpack.c.h.b16 %v1561
  %v2062 = vunpack.c.l.b16 %v1562
  %v2063 = vunpack.c.l.b16 %v1563
  %v2064 = vunpack.c.h.b16 %v1563
  %v2065 = vunpack.c.l.b16 %v1564
  %v2066 = vunpack.c.h.b16 %v1564
  %v2067 = vunpack.c.l.b16 %v1565
  %v2068 = vunpack.c.h.b16 %v1565
  %v2069 = vunpack.c.l.b16 %v1566
  %v2070 = vunpack.c.l.b16 %v1567
  %v2071 = vunpack.c.h.b16 %v1567
  %v2072 = vunpack.c.l.b16 %v1568
  %v2073 = vunpack.c.h.b16 %v1568
  %v2074 = vunpack.c.l.b16 %v1569
  %v2075 = vunpack.c.h.b16 %v1569
  %v2076 = vunpack.c.l.b16 %v1570
  %v2077 = vunpack.c.l.b16 %v1571
  %v2078 = vunpack.c.h.b16 %v1571
  %v2079 = vunpack.c.l.b16 %v1572
  %v2080 = vunpack.c.h.b16 %v1572
  %v2081 = vunpack.c.l.b16 %v1573
  %v2082 = vunpack.c.h.b16 %v1573
  %v2083 = vunpack.c.l.b16 %v1574
  %v2084 = vunpack.c.l.b16 %v1575
  %v2085 = vunpack.c.h.b16 %v1575
  %v2086 = vunpack.c.l.b16 %v1576
  %v2087 = vunpack.c.h.b16 %v1576
  %v2088 = vunpack.c.l.b16 %v1577
  %v2089 = vunpack.c.h.b16 %v1577
  %v2090 = vunpack.c.l.b16 %v1578
  %v2091 = vunpack.c.l.b16 %v1579
  %v2092 = vunpack.c.h.b16 %v1579
  %v2093 = vunpack.c.l.b16 %v1580
  %v2094 = vunpack.c.h.b16 %v1580
  %v2095 = vunpack.c.l.b16 %v1581
  %v2096 = vunpack.c.h.b16 %v1581
  %v2097 = vunpack.c.l.b16 %v1582
  %v2098 = vunpack.c.l.b16 %v1583
  %v2099 = vunpack.c.h.b16 %v1583
  %v2100 = vunpack.c.l.b16 %v1584
  %v2101 = vunpack.c.h.b16 %v1584
  %v2102 = vunpack.c.l.b16 %v1585
  %v2103 = vunpack.c.h.b16 %v1585
  %v2104 = vunpack.c.l.b16 %v1586
  %v2105 = vunpack.c.l.b16 %v1587
  %v2106 = vunpack.c.h.b16 %v1587
  %v2107 = vunpack.c.l.b16 %v1588
  %v2108 = vunpack.c.h.b16 %v1588
  %v2109 = vunpack.c.l.b16 %v1589
  %v2110 = vunpack.c.h.b16 %v1589
  %v2111 = vunpack.c.l.b16 %v1590
  %v2112 = vunpack.c.l.b16 %v1591
  %v2113 = vunpack.c.h.b16 %v1591
  %v2114 = vunpack.c.l.b16 %v1592
  %v2115 = vunpack.c.h.b16 %v1592
  %v2116 = vunpack.c.l.b16 %v1593
  %v2117 = vunpack.c.h.b16 %v1593
  %v2118 = vunpack.c.l.b16 %v1594
  %v2119 = vunpack.c.l.b16 %v1595
  %v2120 = vunpack.c.h.b16 %v1595
  %v2121 = vunpack.c.l.b16 %v1596
  %v2122 = vunpack.c.h.b16 %v1596
  %v2123 = vunpack.c.l.b16 %v1597
  %v2124 = vunpack.c.h.b16 %v1597
  %v2125 = vunpack.c.l.b16 %v1598
  %v2126 = vunpack.c.l.b16 %v1599
  %v2127 = vunpack.c.h.b16 %v1599
  %v2128 = vunpack.c.l.b16 %v1600
  %v2129 = vunpack.c.h.b16 %v1600
  %v2130 = vunpack.c.l.b16 %v1601
  %v2131 = vunpack.c.h.b16 %v1601
  %v2132 = vunpack.c.l.b16 %v1602
  %v2133 = vunpack.c.l.b16 %v1603
  %v2134 = vunpack.c.h.b16 %v1603
  %v2135 = vunpack.c.l.b16 %v1604
  %v2136 = vunpack.c.h.b16 %v1604
  %v2137 = vunpack.c.l.b16 %v1605
  %v2138 = vunpack.c.h.b16 %v1605
  %v2139 = vunpack.c.l.b16 %v1606
  %v2140 = vunpack.c.l.b16 %v1607
  %v2141 = vunpack.c.h.b16 %v1607
  %v2142 = vunpack.c.l.b16 %v1608
  %v2143 = vunpack.c.h.b16 %v1608
  %v2144 = vunpack.c.l.b16 %v1609
  %v2145 = vunpack.c.h.b16 %v1609
  %v2146 = vunpack.c.l.b16 %v1610
  %v2147 = vunpack.c.l.b16 %v1611
  %v2148 = vunpack.c.h.b16 %v1611
  %v2149 = vunpack.c.l.b16 %v1612
  %v2150 = vunpack.c.h.b16 %v1612
  %v2151 = vunpack.c.l.b16 %v1613
  %v2152 = vunpack.c.h.b16 %v1613
  %v2153 = vunpack.c.l.b16 %v1614
  %v2154 = vunpack.c.l.b16 %v1615
  %v2155 = vunpack.c.h.b16 %v1615
  %v2156 = vunpack.c.l.b16 %v1616
  %v2157 = vunpack.c.h.b16 %v1616
  %v2158 = vunpack.c.l.b16 %v1617
  %v2159 = vunpack.c.h.b16 %v1617
  %v2160 = vunpack.c.l.b16 %v1618
  %v2161 = vunpack.c.l.b16 %v1619
  %v2162 = vunpack.c.h.b16 %v1619
  %v2163 = vunpack.c.l.b16 %v1620
  %v2164 = vunpack.c.h.b16 %v1620
  %v2165 = vunpack.c.l.b16 %v1621
  %v2166 = vunpack.c.h.b16 %v1621
  %v2167 = vunpack.c.l.b16 %v1622
  %v2168 = vunpack.c.l.b16 %v1623
  %v2169 = vunpack.c.h.b16 %v1623
  %v2170 = vunpack.c.l.b16 %v1624
  %v2171 = vunpack.c.h.b16 %v1624
  %v2172 = vunpack.c.l.b16 %v1625
  %v2173 = vunpack.c.h.b16 %v1625
  %v2174 = vunpack.c.l.b16 %v1626
  %v2175 = vunpack.c.l.b16 %v1627
  %v2176 = vunpack.c.h.b16 %v1627
  %v2177 = vunpack.c.l.b16 %v1628
  %v2178 = vunpack.c.h.b16 %v1628
  %v2179 = vunpack.c.l.b16 %v1629
  %v2180 = vunpack.c.h.b16 %v1629
  %v2181 = vunpack.c.l.b16 %v1630
  %v2182 = vunpack.c.l.b16 %v1631
  %v2183 = vunpack.c.h.b16 %v1631
  %v2184 = vunpack.c.l.b16 %v1632
  %v2185 = vunpack.c.h.b16 %v1632
  %v2186 = vunpack.c.l.b16 %v1633
  %v2187 = vunpack.c.h.b16 %v1633
  %v2188 = vunpack.c.l.b16 %v1634
  %v2189 = vunpack.c.l.b16 %v1635
  %v2190 = vunpack.c.h.b16 %v1635
  %v2191 = vunpack.c.l.b16 %v1636
  %v2192 = vunpack.c.h.b16 %v1636
  %v2193 = vunpack.c.l.b16 %v1637
  %v2194 = vunpack.c.h.b16 %v1637
  %v2195 = vunpack.c.l.b16 %v1638
  %v2196 = vunpack.c.l.b16 %v1639
  %v2197 = vunpack.c.h.b16 %v1639
  %v2198 = vunpack.c.l.b16 %v1640
  %v2199 = vunpack.c.h.b16 %v1640
  %v2200 = vunpack.c.l.b16 %v1641
  %v2201 = vunpack.c.h.b16 %v1641
  %v2202 = vunpack.c.l.b16 %v1642
  %v2203 = vunpack.c.l.b16 %v1643
  %v2204 = vunpack.c.h.b16 %v1643
  %v2205 = vunpack.c.l.b16 %v1644
  %v2206 = vunpack.c.h.b16 %v1644
  %v2207 = vunpack.c.l.b16 %v1645
  %v2208 = vunpack.c.h.b16 %v1645
  %v2209 = vunpack.c.l.b16 %v1646
  %v2210 = vunpack.c.l.b16 %v1647
  %v2211 = vunpack.c.h.b16 %v1647
  %v2212 = vunpack.c.l.b16 %v1648
  %v2213 = vunpack.c.h.b16 %v1648
  %v2214 = vunpack.c.l.b16 %v1649
  %v2215 = vunpack.c.h.b16 %v1649
  %v2216 = vunpack.c.l.b16 %v1650
  %v2217 = vunpack.c.l.b16 %v1651
  %v2218 = vunpack.c.h.b16 %v1651
  %v2219 = vunpack.c.l.b16 %v1652
  %v2220 = vunpack.c.h.b16 %v1652
  %v2221 = vunpack.c.l.b16 %v1653
  %v2222 = vunpack.c.h.b16 %v1653
  %v2223 = vunpack.c.l.b16 %v1654
  %v2224 = vunpack.c.l.b16 %v1655
  %v2225 = vunpack.c.h.b16 %v1655
  %v2226 = vunpack.c.l.b16 %v1656
  %v2227 = vunpack.c.h.b16 %v1656
  %v2228 = vunpack.c.l.b16 %v1657
  %v2229 = vunpack.c.h.b16 %v1657
  %v2230 = vunpack.c.l.b16 %v1658
  %v2231 = vunpack.c.l.b16 %v1659
  %v2232 = vunpack.c.h.b16 %v1659
  %v2233 = vunpack.c.l.b16 %v1660
  %v2234 = vunpack.c.h.b16 %v1660
  %v2235 = vunpack.c.l.b16 %v1661
  %v2236 = vunpack.c.h.b16 %v1661
  %v2237 = vunpack.c.l.b16 %v1662
  %v2238 = vunpack.c.l.b16 %v1663
  %v2239 = vunpack.c.h.b16 %v1663
  %v2240 = vunpack.c.l.b16 %v1664
  %v2241 = vunpack.c.h.b16 %v1664
  %v2242 = vunpack.c.l.b16 %v1665
  %v2243 = vunpack.c.h.b16 %v1665
  %v2244 = vunpack.c.l.b16 %v1666
  %v2245 = vunpack.c.l.b16 %v1667
  %v2246 = vunpack.c.h.b16 %v1667
  %v2247 = vunpack.c.l.b16 %v1668
  %v2248 = vunpack.c.h.b16 %v1668
  %v2249 = vunpack.c.l.b16 %v1669
  %v2250 = vunpack.c.h.b16 %v1669
  %v2251 = vunpack.c.l.b16 %v1670
  %v2252 = vunpack.c.l.b16 %v1671
  %v2253 = vunpack.c.h.b16 %v1671
  %v2254 = vunpack.c.l.b16 %v1672
  %v2255 = vunpack.c.h.b16 %v1672
  %v2256 = vunpack.c.l.b16 %v1673
  %v2257 = vunpack.c.h.b16 %v1673
  %v2258 = vunpack.c.l.b16 %v1674
  %v2259 = vunpack.c.l.b16 %v1675
  %v2260 = vunpack.c.h.b16 %v1675
  %v2261 = vunpack.c.l.b16 %v1676
  %v2262 = vunpack.c.h.b16 %v1676
  %v2263 = vunpack.c.l.b16 %v1677
  %v2264 = vunpack.c.h.b16 %v1677
  %v2265 = vunpack.c.l.b16 %v1678
  %v2266 = vpack.c.b16 %v1923, %v1916
  %v2267 = vpack.c.b16 %v1924, %v1917
  %v2268 = vpack.c.b16 %v1925, %v1918
  %v2269 = vpack.c.b16 %v1926, %v1919
  %v2270 = vpack.c.b16 %v1927, %v1920
  %v2271 = vpack.c.b16 %v1928, %v1921
  %v2272 = vpack.c.b16 %v1929, %v1922
  %v2273 = vpack.c.b16 %v1937, %v1930
  %v2274 = vpack.c.b16 %v1938, %v1931
  %v2275 = vpack.c.b16 %v1939, %v1932
  %v2276 = vpack.c.b16 %v1940, %v1933
  %v2277 = vpack.c.b16 %v1941, %v1934
  %v2278 = vpack.c.b16 %v1942, %v1935
  %v2279 = vpack.c.b16 %v1943, %v1936
  %v2280 = vpack.c.b16 %v1951, %v1944
  %v2281 = vpack.c.b16 %v1952, %v1945
  %v2282 = vpack.c.b16 %v1953, %v1946
  %v2283 = vpack.c.b16 %v1954, %v1947
  %v2284 = vpack.c.b16 %v1955, %v1948
  %v2285 = vpack.c.b16 %v1956, %v1949
  %v2286 = vpack.c.b16 %v1957, %v1950
  %v2287 = vpack.c.b16 %v1965, %v1958
  %v2288 = vpack.c.b16 %v1966, %v1959
  %v2289 = vpack.c.b16 %v1967, %v1960
  %v2290 = vpack.c.b16 %v1968, %v1961
  %v2291 = vpack.c.b16 %v1969, %v1962
  %v2292 = vpack.c.b16 %v1970, %v1963
  %v2293 = vpack.c.b16 %v1971, %v1964
  %v2294 = vpack.c.b16 %v1979, %v1972
  %v2295 = vpack.c.b16 %v1980, %v1973
  %v2296 = vpack.c.b16 %v1981, %v1974
  %v2297 = vpack.c.b16 %v1982, %v1975
  %v2298 = vpack.c.b16 %v1983, %v1976
  %v2299 = vpack.c.b16 %v1984, %v1977
  %v2300 = vpack.c.b16 %v1985, %v1978
  %v2301 = vpack.c.b16 %v1993, %v1986
  %v2302 = vpack.c.b16 %v1994, %v1987
  %v2303 = vpack.c.b16 %v1995, %v1988
  %v2304 = vpack.c.b16 %v1996, %v1989
  %v2305 = vpack.c.b16 %v1997, %v1990
  %v2306 = vpack.c.b16 %v1998, %v1991
  %v2307 = vpack.c.b16 %v1999, %v1992
  %v2308 = vpack.c.b16 %v2007, %v2000
  %v2309 = vpack.c.b16 %v2008, %v2001
  %v2310 = vpack.c.b16 %v2009, %v2002
  %v2311 = vpack.c.b16 %v2010, %v2003
  %v2312 = vpack.c.b16 %v2011, %v2004
  %v2313 = vpack.c.b16 %v2012, %v2005
  %v2314 = vpack.c.b16 %v2013, %v2006
  %v2315 = vpack.c.b16 %v2021, %v2014
  %v2316 = vpack.c.b16 %v2022, %v2015
  %v2317 = vpack.c.b16 %v2023, %v2016
  %v2318 = vpack.c.b16 %v2024, %v2017
  %v2319 = vpack.c.b16 %v2025, %v2018
  %v2320 = vpack.c.b16 %v2026, %v2019
  %v2321 = vpack.c.b16 %v2027, %v2020
  %v2322 = vpack.c.b16 %v2035, %v2028
  %v2323 = vpack.c.b16 %v2036, %v2029
  %v2324 = vpack.c.b16 %v2037, %v2030
  %v2325 = vpack.c.b16 %v2038, %v2031
  %v2326 = vpack.c.b16 %v2039, %v2032
  %v2327 = vpack.c.b16 %v2040, %v2033
  %v2328 = vpack.c.b16 %v2041, %v2034
  %v2329 = vpack.c.b16 %v2049, %v2042
  %v2330 = vpack.c.b16 %v2050, %v2043
  %v2331 = vpack.c.b16 %v2051, %v2044
  %v2332 = vpack.c.b16 %v2052, %v2045
  %v2333 = vpack.c.b16 %v2053, %v2046
  %v2334 = vpack.c.b16 %v2054, %v2047
  %v2335 = vpack.c.b16 %v2055, %v2048
  %v2336 = vpack.c.b16 %v2063, %v2056
  %v2337 = vpack.c.b16 %v2064, %v2057
  %v2338 = vpack.c.b16 %v2065, %v2058
  %v2339 = vpack.c.b16 %v2066, %v2059
  %v2340 = vpack.c.b16 %v2067, %v2060
  %v2341 = vpack.c.b16 %v2068, %v2061
  %v2342 = vpack.c.b16 %v2069, %v2062
  %v2343 = vpack.c.b16 %v2077, %v2070
  %v2344 = vpack.c.b16 %v2078, %v2071
  %v2345 = vpack.c.b16 %v2079, %v2072
  %v2346 = vpack.c.b16 %v2080, %v2073
  %v2347 = vpack.c.b16 %v2081, %v2074
  %v2348 = vpack.c.b16 %v2082, %v2075
  %v2349 = vpack.c.b16 %v2083, %v2076
  %v2350 = vpack.c.b16 %v2091, %v2084
  %v2351 = vpack.c.b16 %v2092, %v2085
  %v2352 = vpack.c.b16 %v2093, %v2086
  %v2353 = vpack.c.b16 %v2094, %v2087
  %v2354 = vpack.c.b16 %v2095, %v2088
  %v2355 = vpack.c.b16 %v2096, %v2089
  %v2356 = vpack.c.b16 %v2097, %v2090
  %v2357 = vpack.c.b16 %v2105, %v2098
  %v2358 = vpack.c.b16 %v2106, %v2099
  %v2359 = vpack.c.b16 %v2107, %v2100
  %v2360 = vpack.c.b16 %v2108, %v2101
  %v2361 = vpack.c.b16 %v2109, %v2102
  %v2362 = vpack.c.b16 %v2110, %v2103
  %v2363 = vpack.c.b16 %v2111, %v2104
  %v2364 = vpack.c.b16 %v2119, %v2112
  %v2365 = vpack.c.b16 %v2120, %v2113
  %v2366 = vpack.c.b16 %v2121, %v2114
  %v2367 = vpack.c.b16 %v2122, %v2115
  %v2368 = vpack.c.b16 %v2123, %v2116
  %v2369 = vpack.c.b16 %v2124, %v2117
  %v2370 = vpack.c.b16 %v2125, %v2118
  %v2371 = vpack.c.b16 %v2133, %v2126
  %v2372 = vpack.c.b16 %v2134, %v2127
  %v2373 = vpack.c.b16 %v2135, %v2128
  %v2374 = vpack.c.b16 %v2136, %v2129
  %v2375 = vpack.c.b16 %v2137, %v2130
  %v2376 = vpack.c.b16 %v2138, %v2131
  %v2377 = vpack.c.b16 %v2139, %v2132
  %v2378 = vpack.c.b16 %v2147, %v2140
  %v2379 = vpack.c.b16 %v2148, %v2141
  %v2380 = vpack.c.b16 %v2149, %v2142
  %v2381 = vpack.c.b16 %v2150, %v2143
  %v2382 = vpack.c.b16 %v2151, %v2144
  %v2383 = vpack.c.b16 %v2152, %v2145
  %v2384 = vpack.c.b16 %v2153, %v2146
  %v2385 = vpack.c.b16 %v2161, %v2154
  %v2386 = vpack.c.b16 %v2162, %v2155
  %v2387 = vpack.c.b16 %v2163, %v2156
  %v2388 = vpack.c.b16 %v2164, %v2157
  %v2389 = vpack.c.b16 %v2165, %v2158
  %v2390 = vpack.c.b16 %v2166, %v2159
  %v2391 = vpack.c.b16 %v2167, %v2160
  %v2392 = vpack.c.b16 %v2175, %v2168
  %v2393 = vpack.c.b16 %v2176, %v2169
  %v2394 = vpack.c.b16 %v2177, %v2170
  %v2395 = vpack.c.b16 %v2178, %v2171
  %v2396 = vpack.c.b16 %v2179, %v2172
  %v2397 = vpack.c.b16 %v2180, %v2173
  %v2398 = vpack.c.b16 %v2181, %v2174
  %v2399 = vpack.c.b16 %v2189, %v2182
  %v2400 = vpack.c.b16 %v2190, %v2183
  %v2401 = vpack.c.b16 %v2191, %v2184
  %v2402 = vpack.c.b16 %v2192, %v2185
  %v2403 = vpack.c.b16 %v2193, %v2186
  %v2404 = vpack.c.b16 %v2194, %v2187
  %v2405 = vpack.c.b16 %v2195, %v2188
  %v2406 = vpack.c.b16 %v2203, %v2196
  %v2407 = vpack.c.b16 %v2204, %v2197
  %v2408 = vpack.c.b16 %v2205, %v2198
  %v2409 = vpack.c.b16 %v2206, %v2199
  %v2410 = vpack.c.b16 %v2207, %v2200
  %v2411 = vpack.c.b16 %v2208, %v2201
  %v2412 = vpack.c.b16 %v2209, %v2202
  %v2413 = vpack.c.b16 %v2217, %v2210
  %v2414 = vpack.c.b16 %v2218, %v2211
  %v2415 = vpack.c.b16 %v2219, %v2212
  %v2416 = vpack.c.b16 %v2220, %v2213
  %v2417 = vpack.c.b16 %v2221, %v2214
  %v2418 = vpack.c.b16 %v2222, %v2215
  %v2419 = vpack.c.b16 %v2223, %v2216
  %v2420 = vpack.c.b16 %v2231, %v2224
  %v2421 = vpack.c.b16 %v2232, %v2225
  %v2422 = vpack.c.b16 %v2233, %v2226
  %v2423 = vpack.c.b16 %v2234, %v2227
  %v2424 = vpack.c.b16 %v2235, %v2228
  %v2425 = vpack.c.b16 %v2236, %v2229
  %v2426 = vpack.c.b16 %v2237, %v2230
  %v2427 = vpack.c.b16 %v2245, %v2238
  %v2428 = vpack.c.b16 %v2246, %v2239
  %v2429 = vpack.c.b16 %v2247, %v2240
  %v2430 = vpack.c.b16 %v2248, %v2241
  %v2431 = vpack.c.b16 %v2249, %v2242
  %v2432 = vpack.c.b16 %v2250, %v2243
  %v2433 = vpack.c.b16 %v2251, %v2244
  %v2434 = vpack.c.b16 %v2259, %v2252
  %v2435 = vpack.c.b16 %v2260, %v2253
  %v2436 = vpack.c.b16 %v2261, %v2254
  %v2437 = vpack.c.b16 %v2262, %v2255
  %v2438 = vpack.c.b16 %v2263, %v2256
  %v2439 = vpack.c.b16 %v2264, %v2257
  %v2440 = vpack.c.b16 %v2265, %v2258
  %v2617 = vsel %vm1220, %v1478, 0
  %2619 = vmatprep.subr.bf16.mxu0 %v2316
  %2620 = vmatpush1.bf16.msra.mxu0 %v2315
  %2621 = vmatprep.subr.bf16.mxu0 %v2309
  %2622 = vmatpush1.bf16.msra.mxu0 %v2308
  %2623 = vmatprep.subr.bf16.mxu0 %v2302
  %2624 = vmatpush1.bf16.msra.mxu0 %v2301
  %2625 = vmatprep.subr.bf16.mxu0 %v2295
  %2626 = vmatpush1.bf16.msra.mxu0 %v2294
  %2627 = vmatprep.subr.bf16.mxu0 %v2288
  %2628 = vmatpush1.bf16.msra.mxu0 %v2287
  %2629 = vmatprep.subr.bf16.mxu0 %v2281
  %2630 = vmatpush1.bf16.msra.mxu0 %v2280
  %2631 = vmatprep.subr.bf16.mxu0 %v2274
  %2632 = vmatpush1.bf16.msra.mxu0 %v2273
  %2633 = vmatprep.subr.bf16.mxu0 %v2267
  %2634 = vmatpush1.bf16.msra.mxu0 %v2266
  %2635 = vmatprep.subr.bf16.mxu0 %v2372
  %2636 = vmatpush2.bf16.msra.mxu0 %v2371
  %2637 = vmatprep.subr.bf16.mxu0 %v2365
  %2638 = vmatpush2.bf16.msra.mxu0 %v2364
  %2639 = vmatprep.subr.bf16.mxu0 %v2358
  %2640 = vmatpush2.bf16.msra.mxu0 %v2357
  %2641 = vmatprep.subr.bf16.mxu0 %v2351
  %2642 = vmatpush2.bf16.msra.mxu0 %v2350
  %2643 = vmatprep.subr.bf16.mxu0 %v2344
  %2644 = vmatpush2.bf16.msra.mxu0 %v2343
  %2645 = vmatprep.subr.bf16.mxu0 %v2337
  %2646 = vmatpush2.bf16.msra.mxu0 %v2336
  %2647 = vmatprep.subr.bf16.mxu0 %v2330
  %2648 = vmatpush2.bf16.msra.mxu0 %v2329
  %2649 = vmatprep.subr.bf16.mxu0 %v2323
  %2650 = vmatpush2.bf16.msra.mxu0 %v2322
  %2651 = vmatprep.mubr.bf16.mxu0 %v1476
  %2652 = vmatmul.mubr.bf16.gmra.mxu0 %v1475
  %v2653 = vpop.f32.mrf.mxu0
  %v2654 = vadd.f32 %v1684, %v2653
  %v2655 = vpop.f32.mrf.mxu0
  %v2656 = vadd.f32 %v1688, %v2655
  %v2657 = vpop.f32.mrf.mxu0
  %v2658 = vpop.f32.mrf.mxu0
  %2659 = vdwg.mxu0
  %2660 = vmatprep.subr.bf16.mxu0 %v2428
  %2661 = vmatpush1.bf16.msra.mxu0 %v2427
  %2662 = vmatprep.subr.bf16.mxu0 %v2421
  %2663 = vmatpush1.bf16.msra.mxu0 %v2420
  %2664 = vmatprep.subr.bf16.mxu0 %v2414
  %2665 = vmatpush1.bf16.msra.mxu0 %v2413
  %2666 = vmatprep.subr.bf16.mxu0 %v2407
  %2667 = vmatpush1.bf16.msra.mxu0 %v2406
  %2668 = vmatprep.subr.bf16.mxu0 %v2400
  %2669 = vmatpush1.bf16.msra.mxu0 %v2399
  %2670 = vmatprep.subr.bf16.mxu0 %v2393
  %2671 = vmatpush1.bf16.msra.mxu0 %v2392
  %2672 = vmatprep.subr.bf16.mxu0 %v2386
  %2673 = vmatpush1.bf16.msra.mxu0 %v2385
  %2674 = vmatprep.subr.bf16.mxu0 %v2379
  %2675 = vmatpush1.bf16.msra.mxu0 %v2378
  %2676 = vmatprep.subr.bf16.mxu0 0
  %2677 = vmatpush2.bf16.msra.mxu0 0
  %2678 = vmatprep.subr.bf16.mxu0 0
  %2679 = vmatpush2.bf16.msra.mxu0 0
  %2680 = vmatprep.subr.bf16.mxu0 0
  %2681 = vmatpush2.bf16.msra.mxu0 0
  %2682 = vmatprep.subr.bf16.mxu0 0
  %2683 = vmatpush2.bf16.msra.mxu0 0
  %2684 = vmatprep.subr.bf16.mxu0 0
  %2685 = vmatpush2.bf16.msra.mxu0 0
  %2686 = vmatprep.subr.bf16.mxu0 0
  %2687 = vmatpush2.bf16.msra.mxu0 0
  %2688 = vmatprep.subr.bf16.mxu0 0
  %2689 = vmatpush2.bf16.msra.mxu0 0
  %2690 = vmatprep.subr.bf16.mxu0 %v2435
  %2691 = vmatpush2.bf16.msra.mxu0 %v2434
  %2692 = vmatprep.mubr.bf16.mxu0 %v2617
  %2693 = vmatmul.mubr.bf16.gmra.mxu0 %v1477
  %v2694 = vpop.f32.mrf.mxu0
  %v2695 = vadd.f32 %v2654, %v2694
  %v2696 = vpop.f32.mrf.mxu0
  %v2697 = vadd.f32 %v2656, %v2696
  %v2698 = vpop.f32.mrf.mxu0
  %v2699 = vpop.f32.mrf.mxu0
  %2700 = vdwg.mxu0
  %2701 = vmatprep.subr.bf16.mxu0 %v2318
  %2702 = vmatpush1.bf16.msra.mxu0 %v2317
  %2703 = vmatprep.subr.bf16.mxu0 %v2311
  %2704 = vmatpush1.bf16.msra.mxu0 %v2310
  %2705 = vmatprep.subr.bf16.mxu0 %v2304
  %2706 = vmatpush1.bf16.msra.mxu0 %v2303
  %2707 = vmatprep.subr.bf16.mxu0 %v2297
  %2708 = vmatpush1.bf16.msra.mxu0 %v2296
  %2709 = vmatprep.subr.bf16.mxu0 %v2290
  %2710 = vmatpush1.bf16.msra.mxu0 %v2289
  %2711 = vmatprep.subr.bf16.mxu0 %v2283
  %2712 = vmatpush1.bf16.msra.mxu0 %v2282
  %2713 = vmatprep.subr.bf16.mxu0 %v2276
  %2714 = vmatpush1.bf16.msra.mxu0 %v2275
  %2715 = vmatprep.subr.bf16.mxu0 %v2269
  %2716 = vmatpush1.bf16.msra.mxu0 %v2268
  %2717 = vmatprep.subr.bf16.mxu0 %v2374
  %2718 = vmatpush2.bf16.msra.mxu0 %v2373
  %2719 = vmatprep.subr.bf16.mxu0 %v2367
  %2720 = vmatpush2.bf16.msra.mxu0 %v2366
  %2721 = vmatprep.subr.bf16.mxu0 %v2360
  %2722 = vmatpush2.bf16.msra.mxu0 %v2359
  %2723 = vmatprep.subr.bf16.mxu0 %v2353
  %2724 = vmatpush2.bf16.msra.mxu0 %v2352
  %2725 = vmatprep.subr.bf16.mxu0 %v2346
  %2726 = vmatpush2.bf16.msra.mxu0 %v2345
  %2727 = vmatprep.subr.bf16.mxu0 %v2339
  %2728 = vmatpush2.bf16.msra.mxu0 %v2338
  %2729 = vmatprep.subr.bf16.mxu0 %v2332
  %2730 = vmatpush2.bf16.msra.mxu0 %v2331
  %2731 = vmatprep.subr.bf16.mxu0 %v2325
  %2732 = vmatpush2.bf16.msra.mxu0 %v2324
  %2733 = vmatprep.mubr.bf16.mxu0 %v1476
  %2734 = vmatmul.mubr.bf16.gmra.mxu0 %v1475
  %v2735 = vpop.f32.mrf.mxu0
  %v2736 = vadd.f32 %v1692, %v2735
  %v2737 = vpop.f32.mrf.mxu0
  %v2738 = vadd.f32 %v1696, %v2737
  %v2739 = vpop.f32.mrf.mxu0
  %v2740 = vpop.f32.mrf.mxu0
  %2741 = vdwg.mxu0
  %2742 = vmatprep.subr.bf16.mxu0 %v2430
  %2743 = vmatpush1.bf16.msra.mxu0 %v2429
  %2744 = vmatprep.subr.bf16.mxu0 %v2423
  %2745 = vmatpush1.bf16.msra.mxu0 %v2422
  %2746 = vmatprep.subr.bf16.mxu0 %v2416
  %2747 = vmatpush1.bf16.msra.mxu0 %v2415
  %2748 = vmatprep.subr.bf16.mxu0 %v2409
  %2749 = vmatpush1.bf16.msra.mxu0 %v2408
  %2750 = vmatprep.subr.bf16.mxu0 %v2402
  %2751 = vmatpush1.bf16.msra.mxu0 %v2401
  %2752 = vmatprep.subr.bf16.mxu0 %v2395
  %2753 = vmatpush1.bf16.msra.mxu0 %v2394
  %2754 = vmatprep.subr.bf16.mxu0 %v2388
  %2755 = vmatpush1.bf16.msra.mxu0 %v2387
  %2756 = vmatprep.subr.bf16.mxu0 %v2381
  %2757 = vmatpush1.bf16.msra.mxu0 %v2380
  %2758 = vmatprep.subr.bf16.mxu0 0
  %2759 = vmatpush2.bf16.msra.mxu0 0
  %2760 = vmatprep.subr.bf16.mxu0 0
  %2761 = vmatpush2.bf16.msra.mxu0 0
  %2762 = vmatprep.subr.bf16.mxu0 0
  %2763 = vmatpush2.bf16.msra.mxu0 0
  %2764 = vmatprep.subr.bf16.mxu0 0
  %2765 = vmatpush2.bf16.msra.mxu0 0
  %2766 = vmatprep.subr.bf16.mxu0 0
  %2767 = vmatpush2.bf16.msra.mxu0 0
  %2768 = vmatprep.subr.bf16.mxu0 0
  %2769 = vmatpush2.bf16.msra.mxu0 0
  %2770 = vmatprep.subr.bf16.mxu0 0
  %2771 = vmatpush2.bf16.msra.mxu0 0
  %2772 = vmatprep.subr.bf16.mxu0 %v2437
  %2773 = vmatpush2.bf16.msra.mxu0 %v2436
  %2774 = vmatprep.mubr.bf16.mxu0 %v2617
  %2775 = vmatmul.mubr.bf16.gmra.mxu0 %v1477
  %v2776 = vpop.f32.mrf.mxu0
  %v2777 = vadd.f32 %v2736, %v2776
  %v2778 = vpop.f32.mrf.mxu0
  %v2779 = vadd.f32 %v2738, %v2778
  %v2780 = vpop.f32.mrf.mxu0
  %v2781 = vpop.f32.mrf.mxu0
  %2782 = vdwg.mxu0
  %2783 = vmatprep.subr.bf16.mxu0 %v2320
  %2784 = vmatpush1.bf16.msra.mxu0 %v2319
  %2785 = vmatprep.subr.bf16.mxu0 %v2313
  %2786 = vmatpush1.bf16.msra.mxu0 %v2312
  %2787 = vmatprep.subr.bf16.mxu0 %v2306
  %2788 = vmatpush1.bf16.msra.mxu0 %v2305
  %2789 = vmatprep.subr.bf16.mxu0 %v2299
  %2790 = vmatpush1.bf16.msra.mxu0 %v2298
  %2791 = vmatprep.subr.bf16.mxu0 %v2292
  %2792 = vmatpush1.bf16.msra.mxu0 %v2291
  %2793 = vmatprep.subr.bf16.mxu0 %v2285
  %2794 = vmatpush1.bf16.msra.mxu0 %v2284
  %2795 = vmatprep.subr.bf16.mxu0 %v2278
  %2796 = vmatpush1.bf16.msra.mxu0 %v2277
  %2797 = vmatprep.subr.bf16.mxu0 %v2271
  %2798 = vmatpush1.bf16.msra.mxu0 %v2270
  %2799 = vmatprep.subr.bf16.mxu0 %v2376
  %2800 = vmatpush2.bf16.msra.mxu0 %v2375
  %2801 = vmatprep.subr.bf16.mxu0 %v2369
  %2802 = vmatpush2.bf16.msra.mxu0 %v2368
  %2803 = vmatprep.subr.bf16.mxu0 %v2362
  %2804 = vmatpush2.bf16.msra.mxu0 %v2361
  %2805 = vmatprep.subr.bf16.mxu0 %v2355
  %2806 = vmatpush2.bf16.msra.mxu0 %v2354
  %2807 = vmatprep.subr.bf16.mxu0 %v2348
  %2808 = vmatpush2.bf16.msra.mxu0 %v2347
  %2809 = vmatprep.subr.bf16.mxu0 %v2341
  %2810 = vmatpush2.bf16.msra.mxu0 %v2340
  %2811 = vmatprep.subr.bf16.mxu0 %v2334
  %2812 = vmatpush2.bf16.msra.mxu0 %v2333
  %2813 = vmatprep.subr.bf16.mxu0 %v2327
  %2814 = vmatpush2.bf16.msra.mxu0 %v2326
  %2815 = vmatprep.mubr.bf16.mxu0 %v1476
  %2816 = vmatmul.mubr.bf16.gmra.mxu0 %v1475
  %v2817 = vpop.f32.mrf.mxu0
  %v2818 = vadd.f32 %v1700, %v2817
  %v2819 = vpop.f32.mrf.mxu0
  %v2820 = vadd.f32 %v1704, %v2819
  %v2821 = vpop.f32.mrf.mxu0
  %v2822 = vpop.f32.mrf.mxu0
  %2823 = vdwg.mxu0
  %2824 = vmatprep.subr.bf16.mxu0 %v2432
  %2825 = vmatpush1.bf16.msra.mxu0 %v2431
  %2826 = vmatprep.subr.bf16.mxu0 %v2425
  %2827 = vmatpush1.bf16.msra.mxu0 %v2424
  %2828 = vmatprep.subr.bf16.mxu0 %v2418
  %2829 = vmatpush1.bf16.msra.mxu0 %v2417
  %2830 = vmatprep.subr.bf16.mxu0 %v2411
  %2831 = vmatpush1.bf16.msra.mxu0 %v2410
  %2832 = vmatprep.subr.bf16.mxu0 %v2404
  %2833 = vmatpush1.bf16.msra.mxu0 %v2403
  %2834 = vmatprep.subr.bf16.mxu0 %v2397
  %2835 = vmatpush1.bf16.msra.mxu0 %v2396
  %2836 = vmatprep.subr.bf16.mxu0 %v2390
  %2837 = vmatpush1.bf16.msra.mxu0 %v2389
  %2838 = vmatprep.subr.bf16.mxu0 %v2383
  %2839 = vmatpush1.bf16.msra.mxu0 %v2382
  %2840 = vmatprep.subr.bf16.mxu0 0
  %2841 = vmatpush2.bf16.msra.mxu0 0
  %2842 = vmatprep.subr.bf16.mxu0 0
  %2843 = vmatpush2.bf16.msra.mxu0 0
  %2844 = vmatprep.subr.bf16.mxu0 0
  %2845 = vmatpush2.bf16.msra.mxu0 0
  %2846 = vmatprep.subr.bf16.mxu0 0
  %2847 = vmatpush2.bf16.msra.mxu0 0
  %2848 = vmatprep.subr.bf16.mxu0 0
  %2849 = vmatpush2.bf16.msra.mxu0 0
  %2850 = vmatprep.subr.bf16.mxu0 0
  %2851 = vmatpush2.bf16.msra.mxu0 0
  %2852 = vmatprep.subr.bf16.mxu0 0
  %2853 = vmatpush2.bf16.msra.mxu0 0
  %2854 = vmatprep.subr.bf16.mxu0 %v2439
  %2855 = vmatpush2.bf16.msra.mxu0 %v2438
  %2856 = vmatprep.mubr.bf16.mxu0 %v2617
  %2857 = vmatmul.mubr.bf16.gmra.mxu0 %v1477
  %v2858 = vpop.f32.mrf.mxu0
  %v2859 = vadd.f32 %v2818, %v2858
  %v2860 = vpop.f32.mrf.mxu0
  %v2861 = vadd.f32 %v2820, %v2860
  %v2862 = vpop.f32.mrf.mxu0
  %v2863 = vpop.f32.mrf.mxu0
  %2864 = vdwg.mxu0
  %2865 = vmatprep.subr.bf16.mxu0 0
  %2866 = vmatpush1.bf16.msra.mxu0 %v2321
  %2867 = vmatprep.subr.bf16.mxu0 0
  %2868 = vmatpush1.bf16.msra.mxu0 %v2314
  %2869 = vmatprep.subr.bf16.mxu0 0
  %2870 = vmatpush1.bf16.msra.mxu0 %v2307
  %2871 = vmatprep.subr.bf16.mxu0 0
  %2872 = vmatpush1.bf16.msra.mxu0 %v2300
  %2873 = vmatprep.subr.bf16.mxu0 0
  %2874 = vmatpush1.bf16.msra.mxu0 %v2293
  %2875 = vmatprep.subr.bf16.mxu0 0
  %2876 = vmatpush1.bf16.msra.mxu0 %v2286
  %2877 = vmatprep.subr.bf16.mxu0 0
  %2878 = vmatpush1.bf16.msra.mxu0 %v2279
  %2879 = vmatprep.subr.bf16.mxu0 0
  %2880 = vmatpush1.bf16.msra.mxu0 %v2272
  %2881 = vmatprep.subr.bf16.mxu0 0
  %2882 = vmatpush2.bf16.msra.mxu0 %v2377
  %2883 = vmatprep.subr.bf16.mxu0 0
  %2884 = vmatpush2.bf16.msra.mxu0 %v2370
  %2885 = vmatprep.subr.bf16.mxu0 0
  %2886 = vmatpush2.bf16.msra.mxu0 %v2363
  %2887 = vmatprep.subr.bf16.mxu0 0
  %2888 = vmatpush2.bf16.msra.mxu0 %v2356
  %2889 = vmatprep.subr.bf16.mxu0 0
  %2890 = vmatpush2.bf16.msra.mxu0 %v2349
  %2891 = vmatprep.subr.bf16.mxu0 0
  %2892 = vmatpush2.bf16.msra.mxu0 %v2342
  %2893 = vmatprep.subr.bf16.mxu0 0
  %2894 = vmatpush2.bf16.msra.mxu0 %v2335
  %2895 = vmatprep.subr.bf16.mxu0 0
  %2896 = vmatpush2.bf16.msra.mxu0 %v2328
  %2897 = vmatprep.mubr.bf16.mxu0 %v1476
  %2898 = vmatmul.mubr.bf16.gmra.mxu0 %v1475
  %v2899 = vpop.f32.mrf.mxu0
  %v2900 = vadd.f32 %v1708, %v2899
  %v2901 = vpop.f32.mrf.mxu0
  %v2902 = vpop.f32.mrf.mxu0
  %v2903 = vpop.f32.mrf.mxu0
  %2904 = vdwg.mxu0
  %2905 = vmatprep.subr.bf16.mxu0 0
  %2906 = vmatpush1.bf16.msra.mxu0 %v2433
  %2907 = vmatprep.subr.bf16.mxu0 0
  %2908 = vmatpush1.bf16.msra.mxu0 %v2426
  %2909 = vmatprep.subr.bf16.mxu0 0
  %2910 = vmatpush1.bf16.msra.mxu0 %v2419
  %2911 = vmatprep.subr.bf16.mxu0 0
  %2912 = vmatpush1.bf16.msra.mxu0 %v2412
  %2913 = vmatprep.subr.bf16.mxu0 0
  %2914 = vmatpush1.bf16.msra.mxu0 %v2405
  %2915 = vmatprep.subr.bf16.mxu0 0
  %2916 = vmatpush1.bf16.msra.mxu0 %v2398
  %2917 = vmatprep.subr.bf16.mxu0 0
  %2918 = vmatpush1.bf16.msra.mxu0 %v2391
  %2919 = vmatprep.subr.bf16.mxu0 0
  %2920 = vmatpush1.bf16.msra.mxu0 %v2384
  %2921 = vmatprep.subr.bf16.mxu0 0
  %2922 = vmatpush2.bf16.msra.mxu0 0
  %2923 = vmatprep.subr.bf16.mxu0 0
  %2924 = vmatpush2.bf16.msra.mxu0 0
  %2925 = vmatprep.subr.bf16.mxu0 0
  %2926 = vmatpush2.bf16.msra.mxu0 0
  %2927 = vmatprep.subr.bf16.mxu0 0
  %2928 = vmatpush2.bf16.msra.mxu0 0
  %2929 = vmatprep.subr.bf16.mxu0 0
  %2930 = vmatpush2.bf16.msra.mxu0 0
  %2931 = vmatprep.subr.bf16.mxu0 0
  %2932 = vmatpush2.bf16.msra.mxu0 0
  %2933 = vmatprep.subr.bf16.mxu0 0
  %2934 = vmatpush2.bf16.msra.mxu0 0
  %2935 = vmatprep.subr.bf16.mxu0 0
  %2936 = vmatpush2.bf16.msra.mxu0 %v2440
  %2937 = vmatprep.mubr.bf16.mxu0 %v2617
  %2938 = vmatmul.mubr.bf16.gmra.mxu0 %v1477
  %v2939 = vpop.f32.mrf.mxu0
  %v2940 = vadd.f32 %v2900, %v2939
  %v2941 = vpop.f32.mrf.mxu0
  %v2942 = vpop.f32.mrf.mxu0
  %v2943 = vpop.f32.mrf.mxu0
  %2944 = vdwg.mxu0
  %v2945 = vxor.u32 %v2695, 2147483648
  %v2946 = vxor.u32 %v2697, 2147483648
  %v2947 = vxor.u32 %v2777, 2147483648
  %v2948 = vxor.u32 %v2779, 2147483648
  %v2949 = vxor.u32 %v2859, 2147483648
  %v2950 = vxor.u32 %v2861, 2147483648
  %v2951 = vxor.u32 %v2940, 2147483648
  %v2952 = vmul.f32 %v2945, 1.442695
  %v2953 = vpow.pop %v2952
  %v2954 = vmul.f32 %v2946, 1.442695
  %v2955 = vpow.pop %v2954
  %v2956 = vmul.f32 %v2947, 1.442695
  %v2957 = vpow.pop %v2956
  %v2958 = vmul.f32 %v2948, 1.442695
  %v2959 = vpow.pop %v2958
  %v2960 = vmul.f32 %v2949, 1.442695
  %v2961 = vpow.pop %v2960
  %v2962 = vmul.f32 %v2950, 1.442695
  %v2963 = vpow.pop %v2962
  %v2964 = vmul.f32 %v2951, 1.442695
  %v2965 = vpow.pop %v2964
  %v2966 = vadd.f32 %v2953, 1.0
  %v2967 = vadd.f32 %v2955, 1.0
  %v2968 = vadd.f32 %v2957, 1.0
  %v2969 = vadd.f32 %v2959, 1.0
  %v2970 = vadd.f32 %v2961, 1.0
  %v2971 = vadd.f32 %v2963, 1.0
  %v2972 = vadd.f32 %v2965, 1.0
  %v2973 = vrcp.pop %v2966
  %v2974 = vmul.f32 1.0, %v2973
  %v2975 = vrcp.pop %v2967
  %v2976 = vmul.f32 1.0, %v2975
  %v2977 = vrcp.pop %v2968
  %v2978 = vmul.f32 1.0, %v2977
  %v2979 = vrcp.pop %v2969
  %v2980 = vmul.f32 1.0, %v2979
  %v2981 = vrcp.pop %v2970
  %v2982 = vmul.f32 1.0, %v2981
  %v2983 = vrcp.pop %v2971
  %v2984 = vmul.f32 1.0, %v2983
  %v2985 = vrcp.pop %v2972
  %v2986 = vmul.f32 1.0, %v2985
  %v2987 = vpack.c.bf16 %v2974, %v2974
  %v2988 = vpack.c.bf16 %v2976, %v2976
  %v2989 = vpack.c.bf16 %v2978, %v2978
  %v2990 = vpack.c.bf16 %v2980, %v2980
  %v2991 = vpack.c.bf16 %v2982, %v2982
  %v2992 = vpack.c.bf16 %v2984, %v2984
  %v2993 = vpack.c.bf16 %v2986, %v2986
  %v3001 = vunpack.c.l.b16 %v2987
  %v3002 = vunpack.c.l.b16 %v2988
  %v3003 = vunpack.c.l.b16 %v2989
  %v3004 = vunpack.c.l.b16 %v2990
  %v3005 = vunpack.c.l.b16 %v2991
  %v3006 = vunpack.c.l.b16 %v2992
  %v3007 = vunpack.c.l.b16 %v2993
  %v3008 = vpack.c.b16 %v3002, %v3001
  %v3009 = vpack.c.b16 %v3004, %v3003
  %v3010 = vpack.c.b16 %v3006, %v3005
  %v3011 = vpack.c.b16 %v3007, %v3007
  %3016 = vst [vmem:[%s10] sm:$0xff] %v3008
  %3017 = vst [vmem:[%s10 + $0x8] sm:$0xff] %v3009
  %3018 = vst [vmem:[%s10 + $0x10] sm:$0xff] %v3010
  %vm3019 = vcmask 125952
  %3020 = vst.msk [vmem:[%s10 + $0x18] sm:$0xf] %vm3019, %v3011
  %vm3021 = vcmask 326656
  %3022 = vst.msk [vmem:[%s11] sm:$0xff] %vm3021, %v1299
  // Predicated region
  $region42: #{vae_forward.1} parent=0 // pred_check
    _
  $region43: #{vae_forward.1} parent=0 // pred_check_branch
    %3024 = sbr.rel (0) target = $region45
  $region44: #{vae_forward.1} parent=0 // pred_region
    _
  $region45: #{vae_forward.1} parent=0 // pred_fallthru
    _
  // Predicated region
  $region46: #{vae_forward.1} parent=0 // pred_check
    _
  $region47: #{vae_forward.1} parent=0 // pred_check_branch
    %3026 = sbr.rel (0) target = $region49
  $region48: #{vae_forward.1} parent=0 // pred_region
    _
  $region49: #{vae_forward.1} parent=0 // pred_fallthru
    _
  // Predicated region
  $region50: #{vae_forward.1} parent=0 // pred_check
    _
  $region51: #{vae_forward.1} parent=0 // pred_check_branch
    %3028 = sbr.rel (0) target = $region53
  $region52: #{vae_forward.1} parent=0 // pred_region
    _
  $region53: #{vae_forward.1} parent=0 // pred_fallthru
    _
  // Predicated region
  $region54: #{vae_forward.1} parent=0 // pred_check
    _
  $region55: #{vae_forward.1} parent=0 // pred_check_branch
    %3030 = sbr.rel (0) target = $region57
  $region56: #{vae_forward.1} parent=0 // pred_region
    _
  $region57: #{vae_forward.1} parent=0 // pred_fallthru
    _

</llo_original>
